<compile_context>
chip_gen: v5e
topology: v5e:2x2
jax: 0.10.0
libtpu: 0.0.40
codegen_flags: <defaults>
</compile_context>

<pallas_src>
import functools

import jax
import jax.numpy as jnp
from jax.experimental import pallas as pl
from jax.experimental.pallas import tpu as pltpu


# --------------------------------------------------------------------------------------
# Kernel
# --------------------------------------------------------------------------------------
def _camil_kernel(x_ref, adj_ref, mask_ref, wk_ref, wqv_ref, out_ref, km_s, w_s, *,
                  att_pad, inv_scale, block_r, num_rt, cdtype, approx_recip):
    """One grid step = one row tile of adj for one batch element.

    Grid = (B, num_rt); the row-tile axis is sequential ("arbitrary"):
      rt == 0:    masked key projection km = m (.) (X @ Wk), chunked block_r rows at a
                  time (bounds the live temp, overlaps the first adj DMAs).
      every rt:   t = adj[rows] @ km (MXU, the only O(N^2) work);
                  [q | v] = X[rows] @ W[q|v];  w[rows] = inv_scale * rowdot(m*q, t);
                  v rows are written straight into the resident output block.
      rt == last: exact whole-bag softmax over the stored logits, rescale the output
                  block in place.
    """
    rt = pl.program_id(1)

    # ---- per-batch prologue: masked key projection (the only pre-tile-0 work) --------
    @pl.when(rt == 0)
    def _init():
        wk_mat = wk_ref[...]                                        # (in_dim, att_pad)

        def chunk(c, carry):
            r0 = pl.multiple_of(c * block_r, block_r)
            xc = x_ref[pl.ds(r0, block_r), :].astype(cdtype)
            kc = jnp.dot(xc, wk_mat, preferred_element_type=jnp.float32)
            mc = mask_ref[pl.ds(r0, block_r), :]                    # (block_r, 1)
            km_s[pl.ds(r0, block_r), :] = (mc * kc).astype(km_s.dtype)
            return carry

        jax.lax.fori_loop(0, num_rt, chunk, 0)

    # ---- every tile -------------------------------------------------------------------
    r0 = pl.multiple_of(rt * block_r, block_r)

    a_tile = adj_ref[...].astype(cdtype)                            # (block_r, N)
    t = jnp.dot(a_tile, km_s[...], preferred_element_type=jnp.float32)   # (block_r, att_pad)

    x_rows = x_ref[pl.ds(r0, block_r), :].astype(cdtype)            # (block_r, in_dim)
    qv = jnp.dot(x_rows, wqv_ref[...], preferred_element_type=jnp.float32)
    m_rows = mask_ref[pl.ds(r0, block_r), :]                        # (block_r, 1)
    q_rows = m_rows * qv[:, :att_pad]                               # lane-aligned slice

    # TODO(synk): a lane-dense logit scratch ((num_rt, block_r)) would shrink the finalize
    # epilogue ~128x, but needs a (block_r,1)->(1,block_r) relayout per tile whose
    # lowering is less robust; kept as a sublane-major (N, 1) column.
    w_s[pl.ds(r0, block_r), :] = inv_scale * jnp.sum(q_rows * t, axis=-1, keepdims=True)

    # v rows go straight into the (VMEM-resident) output block; rescaled at finalize.
    out_ref[pl.ds(r0, block_r), :] = qv[:, att_pad:].astype(out_ref.dtype)

    # ---- finalize: exact whole-bag softmax (matches torch softmax(dim=1)) -------------
    @pl.when(rt == num_rt - 1)
    def _final():
        w = w_s[...]                                                # (N, 1)
        w = w - jnp.max(w, axis=0, keepdims=True)
        e = jnp.exp(w)
        denom = jnp.sum(e, axis=0, keepdims=True)
        p = e * pl.reciprocal(denom, approx=approx_recip)
        out_ref[...] = (p * out_ref[...].astype(jnp.float32)).astype(out_ref.dtype)


# --------------------------------------------------------------------------------------
# Wrapper
# --------------------------------------------------------------------------------------
def _snap_block_r(N, want):
    """Largest multiple-of-8 divisor of N that is <= want (sublane-aligned, no partial
    adj row tiles)."""
    if N % 8 != 0:
        # TODO(synk): pad the bag axis to a multiple of 8 (with -inf logits for the pad)
        # instead of falling back to a single full-N adj tile; rare for real WSI bags.
        return N
    want = int(max(8, min(want, N)))
    want -= want % 8
    for d in range(want, 7, -8):
        if N % d == 0:
            return d
    return 8


def _resident_spec(shape, index_map):
    """BlockSpec for an operand whose block index is constant over the row-tile axis:
    single-buffer it so it does not pay the default double-buffer VMEM."""
    buffered = getattr(pl, "Buffered", None)
    if buffered is not None:
        try:
            return pl.BlockSpec(shape, index_map, pipeline_mode=buffered(1))
        except TypeError:   # pipeline_mode kwarg unavailable -> default buffering
            pass
    return pl.BlockSpec(shape, index_map)


def camil_self_attention(X, adj, wq, wk, wv, mask=None, *, block_r=None, fast=True,
                         vmem_limit_bytes=None):
    """Pallas implementation of CAMILSelfAttention.forward.

    X:   (B, N, in_dim)     adj: (B, N, N)       mask: (B, N) or None
    wq, wk: (in_dim, att_dim) (torch qk_nn.weight.T chunks),  wv: (in_dim, in_dim)
    block_r: adj row-tile size; auto-picked from a per-chip VMEM budget if None
             (the knob to sweep on real shapes).
    fast=True:  bf16 matmuls (f32 accumulation) + approx reciprocal. Pass adj already in
                bf16 to also halve the dominant HBM stream.
    fast=False: all-f32, exact reciprocal (reference-faithful path).
    Returns L: (B, N, in_dim) in X.dtype.
    """
    B, N, in_dim = X.shape
    att_dim = wq.shape[1]
    att_pad = -(-att_dim // 128) * 128            # lane-align the q | v slice boundaries
    inv_scale = 1.0 / (att_dim ** 0.5)
    cdtype = jnp.bfloat16 if fast else jnp.float32
    cb = jnp.dtype(cdtype).itemsize

    if mask is None:
        mask3 = jnp.ones((B, N, 1), jnp.float32)
    else:
        mask3 = mask.astype(jnp.float32).reshape(B, N, 1)

    pad = att_pad - att_dim                        # zero columns: dot products unchanged
    wk_p = jnp.pad(wk, ((0, 0), (0, pad))).astype(cdtype)                  # (in_dim, att_pad)
    wqv = jnp.concatenate(
        [jnp.pad(wq, ((0, 0), (0, pad))), wv], axis=1).astype(cdtype)      # (in_dim, att_pad+in_dim)

    # ---- per-chip VMEM budget: v5e/v6e (128 MiB) -> ~100 MiB scoped, tiles up to 512;
    #      v7x (64 MiB) -> ~56 MiB scoped, tiles capped at 256. --------------------------
    try:
        vmem_cap = int(pltpu.get_tpu_info().vmem_capacity_bytes)
    except Exception:                              # query unavailable -> assume 64 MiB (safe)
        vmem_cap = 64 << 20
    if vmem_limit_bytes is None:
        vmem_limit_bytes = min(100 << 20, vmem_cap - (8 << 20))
    cap = 512 if vmem_cap >= (100 << 20) else 256

    xb, ob, ab = X.dtype.itemsize, X.dtype.itemsize, adj.dtype.itemsize
    resident = (N * in_dim * (xb + ob)                       # X + out blocks (single-buffered)
                + 2 * N * 128 * 4                            # mask + logits ((N,1), lane-padded)
                + N * att_pad * cb                           # masked-k scratch
                + in_dim * (2 * att_pad + in_dim) * cb)      # weights
    per_row = (2 * N * ab                                    # adj double-buffer
               + (N * cb if adj.dtype != cdtype else 0)      # in-kernel adj cast temp
               + 16 * (att_pad + in_dim))                    # per-tile matmul temps
    avail = int(vmem_limit_bytes) - resident - (4 << 20)
    budget_r = max(8, avail // per_row) if avail > 0 else 8

    want = min(cap, budget_r) if block_r is None else block_r
    block_r = _snap_block_r(N, want)
    num_rt = N // block_r

    kernel = functools.partial(
        _camil_kernel, att_pad=att_pad, inv_scale=inv_scale, block_r=block_r,
        num_rt=num_rt, cdtype=cdtype, approx_recip=fast)

    cost = pl.CostEstimate(
        flops=int(2 * B * (N * N * att_pad + N * in_dim * (2 * att_pad + in_dim))),
        transcendentals=int(B * N),
        bytes_accessed=int(adj.size * ab + X.size * xb + mask3.size * 4
                           + (wk_p.size + wqv.size) * cb + B * N * in_dim * ob),
    )

    # TODO(synk): for B == 1 on v7x, split the row-tile axis across the two TensorCores
    # (two-pass / online softmax with a cross-core combine); currently only the batch
    # axis is parallel, so a single bag uses one core.
    return pl.pallas_call(
        kernel,
        out_shape=jax.ShapeDtypeStruct((B, N, in_dim), X.dtype),
        grid_spec=pltpu.PrefetchScalarGridSpec(
            num_scalar_prefetch=0,
            grid=(B, num_rt),
            in_specs=[
                _resident_spec((None, N, in_dim), lambda b, r: (b, 0, 0)),        # X
                pl.BlockSpec((None, block_r, N), lambda b, r: (b, r, 0)),         # adj rows
                _resident_spec((None, N, 1), lambda b, r: (b, 0, 0)),             # mask
                _resident_spec((in_dim, att_pad), lambda b, r: (0, 0)),           # Wk
                _resident_spec((in_dim, att_pad + in_dim), lambda b, r: (0, 0)),  # W[q|v]
            ],
            out_specs=_resident_spec((None, N, in_dim), lambda b, r: (b, 0, 0)),
            scratch_shapes=[
                pltpu.VMEM((N, att_pad), cdtype),     # masked keys (resident per batch)
                pltpu.VMEM((N, 1), jnp.float32),      # whole-bag logits
            ],
        ),
        compiler_params=pltpu.CompilerParams(
            dimension_semantics=("parallel", "arbitrary"),
            vmem_limit_bytes=int(vmem_limit_bytes)),
        cost_estimate=cost,
    )(X, adj, mask3, wk_p, wqv)


def camil_self_attention_ref(X, adj, wq, wk, wv, mask=None):
    """Pure-JAX reference mirroring the PyTorch forward exactly."""
    B, N, _ = X.shape
    att_dim = wq.shape[1]
    if mask is None:
        mask2d = jnp.ones((B, N, N), dtype=X.dtype)
    else:
        mask2d = mask[:, :, None] * mask[:, None, :]
    q = X @ wq
    k = X @ wk
    v = X @ wv
    inv_scale = 1.0 / (att_dim ** 0.5)
    w = inv_scale * jnp.sum(
        (q @ jnp.swapaxes(k, -2, -1)) * adj * mask2d, axis=-1, keepdims=True)
    p = jax.nn.softmax(w, axis=1)
    return p * v


if __name__ == "__main__":
    # Small but non-trivial: bag of 256 instances so the explicit block_r=128 run streams
    # adj in 2 row tiles (exercising init / per-tile / finalize), plus an auto-tiled fast
    # run that exercises the per-chip VMEM budgeting and the bf16 path.
    B, N, in_dim, att_dim = 2, 256, 32, 64

    key = jax.random.PRNGKey(0)
    kx, kadj, kmask, kq, kk, kv = jax.random.split(key, 6)

    X = jax.random.normal(kx, (B, N, in_dim), dtype=jnp.float32)
    adj = jax.random.uniform(kadj, (B, N, N), dtype=jnp.float32)
    mask = (jax.random.uniform(kmask, (B, N)) > 0.2).astype(jnp.float32)

    bound = 1.0 / (in_dim ** 0.5)                  # nn.Linear default init, bias=False
    wq = jax.random.uniform(kq, (in_dim, att_dim), jnp.float32, minval=-bound, maxval=bound)
    wk = jax.random.uniform(kk, (in_dim, att_dim), jnp.float32, minval=-bound, maxval=bound)
    wv = jax.random.uniform(kv, (in_dim, in_dim), jnp.float32, minval=-bound, maxval=bound)

    ref = camil_self_attention_ref(X, adj, wq, wk, wv, mask)

    # Precise path: f32 everywhere, explicit block_r=128 -> 2 adj row tiles per batch.
    out = jax.block_until_ready(
        camil_self_attention(X, adj, wq, wk, wv, mask, block_r=128, fast=False))
    assert out.shape == (B, N, in_dim)
    err = float(jnp.max(jnp.abs(out - ref)))
    assert jnp.allclose(out, ref, atol=1e-4, rtol=1e-4), f"precise max abs err = {err}"

    # Fast path: bf16 adj stream (pre-cast by the caller), bf16 matmuls, approx
    # reciprocal, auto block_r from the per-chip VMEM budget.
    out_fast = jax.block_until_ready(
        camil_self_attention(X, adj.astype(jnp.bfloat16), wq, wk, wv, mask, fast=True))
    err_fast = float(jnp.max(jnp.abs(out_fast - ref)))
    assert jnp.allclose(out_fast, ref, atol=5e-2, rtol=5e-2), f"fast max abs err = {err_fast}"

    print("KERNEL_OK")
</pallas_src>

<mosaic_0001>
module attributes {stable_mosaic.version = 11 : i64} {
  func.func @_camil_kernel(%arg0: i32, %arg1: i32, %arg2: memref<1x256x32xf32, #tpu.memory_space<vmem>>, %arg3: memref<1x128x256xf32, #tpu.memory_space<vmem>>, %arg4: memref<1x256x1xf32, #tpu.memory_space<vmem>>, %arg5: memref<32x128xf32, #tpu.memory_space<vmem>>, %arg6: memref<32x160xf32, #tpu.memory_space<vmem>>, %arg7: memref<1x256x32xf32, #tpu.memory_space<vmem>>, %arg8: memref<256x128xf32, #tpu.memory_space<vmem>>, %arg9: memref<256x1xf32, #tpu.memory_space<vmem>>) attributes {dimension_semantics = [#tpu.dimension_semantics<parallel>, #tpu.dimension_semantics<arbitrary>], iteration_bounds = array<i64: 2, 2>, scalar_prefetch = 0 : i64, scratch_operands = 2 : i64, tpu.core_type = #tpu.core_type<tc>, window_params = [{pipeline_mode = #tpu.pipeline_mode<synchronous>, transform_indices = @transform_0, window_bounds = array<i64: 1, 256, 32>}, {transform_indices = @transform_1, window_bounds = array<i64: 1, 128, 256>}, {pipeline_mode = #tpu.pipeline_mode<synchronous>, transform_indices = @transform_2, window_bounds = array<i64: 1, 256, 1>}, {pipeline_mode = #tpu.pipeline_mode<synchronous>, transform_indices = @transform_3, window_bounds = array<i64: 32, 128>}, {pipeline_mode = #tpu.pipeline_mode<synchronous>, transform_indices = @transform_4, window_bounds = array<i64: 32, 160>}, {pipeline_mode = #tpu.pipeline_mode<synchronous>, transform_indices = @transform_5, window_bounds = array<i64: 1, 256, 32>}]} {
    %c0_i32 = arith.constant 0 : i32
    %0 = arith.cmpi eq, %arg1, %c0_i32 : i32
    %1 = arith.extui %0 : i1 to i32
    %c0_i32_0 = arith.constant 0 : i32
    %2 = arith.cmpi ne, %1, %c0_i32_0 : i32
    scf.if %2 {
      %c0_18 = arith.constant 0 : index
      %c0_19 = arith.constant 0 : index
      %35 = vector.load %arg5[%c0_18, %c0_19] : memref<32x128xf32, #tpu.memory_space<vmem>>, vector<32x128xf32>
      %c0_i32_20 = arith.constant 0 : i32
      %c2_i32 = arith.constant 2 : i32
      %36 = arith.addi %c0_i32_20, %c2_i32 : i32
      %c1_i32_21 = arith.constant 1 : i32
      scf.for %arg10 = %c0_i32_20 to %36 step %c1_i32_21  : i32 {
        %c128_i32_23 = arith.constant 128 : i32
        %37 = arith.muli %arg10, %c128_i32_23 : i32
        %38 = tpu.assume_multiple %37, 128 : i32
        %c0_24 = arith.constant 0 : index
        %39 = arith.index_cast %38 : i32 to index
        %c0_25 = arith.constant 0 : index
        %40 = vector.load %arg2[%c0_24, %39, %c0_25] : memref<1x256x32xf32, #tpu.memory_space<vmem>>, vector<1x128x32xf32>
        %41 = vector.shape_cast %40 : vector<1x128x32xf32> to vector<128x32xf32>
        %cst_26 = arith.constant dense<0.000000e+00> : vector<128x128xf32>
        %42 = tpu.matmul %41, %35, %cst_26 {dimension_numbers = #tpu.dot_dimension_numbers<[1], [0], [0], [1], [0, 0, 1, 1], [], []>} : vector<128x32xf32>, vector<32x128xf32>, vector<128x128xf32> -> vector<128x128xf32>
        %c0_27 = arith.constant 0 : index
        %43 = arith.index_cast %38 : i32 to index
        %c0_28 = arith.constant 0 : index
        %44 = vector.load %arg4[%c0_27, %43, %c0_28] : memref<1x256x1xf32, #tpu.memory_space<vmem>>, vector<1x128x1xf32>
        %45 = vector.shape_cast %44 : vector<1x128x1xf32> to vector<128x1xf32>
        %46 = vector.broadcast %45 : vector<128x1xf32> to vector<128x128xf32>
        %47 = arith.mulf %46, %42 : vector<128x128xf32>
        %48 = arith.index_cast %38 : i32 to index
        %c0_29 = arith.constant 0 : index
        %49 = vector.load %arg8[%48, %c0_29] : memref<256x128xf32, #tpu.memory_space<vmem>>, vector<128x128xf32>
        tpu.vector_store %arg8[%48, %c0_29], %47 {strides = array<i32>} : memref<256x128xf32, #tpu.memory_space<vmem>>, vector<128x128xf32>,
      }
      %c2_i32_22 = arith.constant 2 : i32
    } else {
    }
    %c128_i32 = arith.constant 128 : i32
    %3 = arith.muli %arg1, %c128_i32 : i32
    %4 = tpu.assume_multiple %3, 128 : i32
    %c0 = arith.constant 0 : index
    %c0_1 = arith.constant 0 : index
    %c0_2 = arith.constant 0 : index
    %5 = vector.load %arg3[%c0, %c0_1, %c0_2] : memref<1x128x256xf32, #tpu.memory_space<vmem>>, vector<1x128x256xf32>
    %6 = vector.shape_cast %5 : vector<1x128x256xf32> to vector<128x256xf32>
    %c0_3 = arith.constant 0 : index
    %c0_4 = arith.constant 0 : index
    %7 = vector.load %arg8[%c0_3, %c0_4] : memref<256x128xf32, #tpu.memory_space<vmem>>, vector<256x128xf32>
    %cst = arith.constant dense<0.000000e+00> : vector<128x128xf32>
    %8 = tpu.matmul %6, %7, %cst {dimension_numbers = #tpu.dot_dimension_numbers<[1], [0], [0], [1], [0, 0, 1, 1], [], []>} : vector<128x256xf32>, vector<256x128xf32>, vector<128x128xf32> -> vector<128x128xf32>
    %c0_5 = arith.constant 0 : index
    %9 = arith.index_cast %4 : i32 to index
    %c0_6 = arith.constant 0 : index
    %10 = vector.load %arg2[%c0_5, %9, %c0_6] : memref<1x256x32xf32, #tpu.memory_space<vmem>>, vector<1x128x32xf32>
    %11 = vector.shape_cast %10 : vector<1x128x32xf32> to vector<128x32xf32>
    %c0_7 = arith.constant 0 : index
    %c0_8 = arith.constant 0 : index
    %12 = vector.load %arg6[%c0_7, %c0_8] : memref<32x160xf32, #tpu.memory_space<vmem>>, vector<32x160xf32>
    %cst_9 = arith.constant dense<0.000000e+00> : vector<128x160xf32>
    %13 = tpu.matmul %11, %12, %cst_9 {dimension_numbers = #tpu.dot_dimension_numbers<[1], [0], [0], [1], [0, 0, 1, 1], [], []>} : vector<128x32xf32>, vector<32x160xf32>, vector<128x160xf32> -> vector<128x160xf32>
    %c0_10 = arith.constant 0 : index
    %14 = arith.index_cast %4 : i32 to index
    %c0_11 = arith.constant 0 : index
    %15 = vector.load %arg4[%c0_10, %14, %c0_11] : memref<1x256x1xf32, #tpu.memory_space<vmem>>, vector<1x128x1xf32>
    %16 = vector.shape_cast %15 : vector<1x128x1xf32> to vector<128x1xf32>
    %17 = vector.extract_strided_slice %13 {offsets = [0, 0], sizes = [128, 128], strides = [1, 1]} : vector<128x160xf32> to vector<128x128xf32>
    %18 = vector.broadcast %16 : vector<128x1xf32> to vector<128x128xf32>
    %19 = arith.mulf %18, %17 : vector<128x128xf32>
    %20 = arith.mulf %19, %8 : vector<128x128xf32>
    %cst_12 = arith.constant dense<0.000000e+00> : vector<128xf32>
    %21 = vector.multi_reduction <add>, %20, %cst_12 [1] : vector<128x128xf32> to vector<128xf32>
    %22 = vector.shape_cast %21 : vector<128xf32> to vector<128x1xf32>
    %cst_13 = arith.constant 1.250000e-01 : f32
    %23 = vector.broadcast %cst_13 : f32 to vector<128x1xf32>
    %24 = arith.mulf %23, %22 : vector<128x1xf32>
    %25 = arith.index_cast %4 : i32 to index
    %c0_14 = arith.constant 0 : index
    %26 = vector.load %arg9[%25, %c0_14] : memref<256x1xf32, #tpu.memory_space<vmem>>, vector<128x1xf32>
    tpu.vector_store %arg9[%25, %c0_14], %24 {strides = array<i32>} : memref<256x1xf32, #tpu.memory_space<vmem>>, vector<128x1xf32>,
    %27 = vector.extract_strided_slice %13 {offsets = [0, 128], sizes = [128, 32], strides = [1, 1]} : vector<128x160xf32> to vector<128x32xf32>
    %c0_15 = arith.constant 0 : index
    %28 = arith.index_cast %4 : i32 to index
    %c0_16 = arith.constant 0 : index
    %29 = vector.load %arg7[%c0_15, %28, %c0_16] : memref<1x256x32xf32, #tpu.memory_space<vmem>>, vector<1x128x32xf32>
    %30 = vector.shape_cast %29 : vector<1x128x32xf32> to vector<128x32xf32>
    %31 = vector.shape_cast %27 : vector<128x32xf32> to vector<1x128x32xf32>
    tpu.vector_store %arg7[%c0_15, %28, %c0_16], %31 {strides = array<i32>} : memref<1x256x32xf32, #tpu.memory_space<vmem>>, vector<1x128x32xf32>,
    %c1_i32 = arith.constant 1 : i32
    %32 = arith.cmpi eq, %arg1, %c1_i32 : i32
    %33 = arith.extui %32 : i1 to i32
    %c0_i32_17 = arith.constant 0 : i32
    %34 = arith.cmpi ne, %33, %c0_i32_17 : i32
    scf.if %34 {
      %c0_18 = arith.constant 0 : index
      %c0_19 = arith.constant 0 : index
      %35 = vector.load %arg9[%c0_18, %c0_19] : memref<256x1xf32, #tpu.memory_space<vmem>>, vector<256x1xf32>
      %cst_20 = arith.constant dense<0xFF800000> : vector<1xf32>
      %36 = vector.multi_reduction <maximumf>, %35, %cst_20 [0] : vector<256x1xf32> to vector<1xf32>
      %37 = vector.shape_cast %36 : vector<1xf32> to vector<1x1xf32>
      %38 = vector.broadcast %37 : vector<1x1xf32> to vector<256x1xf32>
      %39 = arith.subf %35, %38 : vector<256x1xf32>
      %40 = math.exp %39 : vector<256x1xf32>
      %cst_21 = arith.constant dense<0.000000e+00> : vector<1xf32>
      %41 = vector.multi_reduction <add>, %40, %cst_21 [0] : vector<256x1xf32> to vector<1xf32>
      %42 = vector.shape_cast %41 : vector<1xf32> to vector<1x1xf32>
      %43 = tpu.reciprocal %42 : vector<1x1xf32> -> vector<1x1xf32>
      %44 = vector.broadcast %43 : vector<1x1xf32> to vector<256x1xf32>
      %45 = arith.mulf %40, %44 : vector<256x1xf32>
      %c0_22 = arith.constant 0 : index
      %c0_23 = arith.constant 0 : index
      %c0_24 = arith.constant 0 : index
      %46 = vector.load %arg7[%c0_22, %c0_23, %c0_24] : memref<1x256x32xf32, #tpu.memory_space<vmem>>, vector<1x256x32xf32>
      %47 = vector.shape_cast %46 : vector<1x256x32xf32> to vector<256x32xf32>
      %48 = vector.broadcast %45 : vector<256x1xf32> to vector<256x32xf32>
      %49 = arith.mulf %48, %47 : vector<256x32xf32>
      %c0_25 = arith.constant 0 : index
      %c0_26 = arith.constant 0 : index
      %c0_27 = arith.constant 0 : index
      %50 = vector.load %arg7[%c0_25, %c0_26, %c0_27] : memref<1x256x32xf32, #tpu.memory_space<vmem>>, vector<1x256x32xf32>
      %51 = vector.shape_cast %50 : vector<1x256x32xf32> to vector<256x32xf32>
      %52 = vector.shape_cast %49 : vector<256x32xf32> to vector<1x256x32xf32>
      tpu.vector_store %arg7[%c0_25, %c0_26, %c0_27], %52 {strides = array<i32>} : memref<1x256x32xf32, #tpu.memory_space<vmem>>, vector<1x256x32xf32>,
    } else {
    }
    return
  }
  func.func @transform_0(%arg0: i32, %arg1: i32) -> (i32, i32, i32) {
    %c0_i32 = arith.constant 0 : i32
    %c0_i32_0 = arith.constant 0 : i32
    %c0_i32_1 = arith.constant 0 : i32
    return %arg0, %c0_i32, %c0_i32_0 : i32, i32, i32
  }
  func.func @transform_1(%arg0: i32, %arg1: i32) -> (i32, i32, i32) {
    %c0_i32 = arith.constant 0 : i32
    %c0_i32_0 = arith.constant 0 : i32
    return %arg0, %arg1, %c0_i32 : i32, i32, i32
  }
  func.func @transform_2(%arg0: i32, %arg1: i32) -> (i32, i32, i32) {
    %c0_i32 = arith.constant 0 : i32
    %c0_i32_0 = arith.constant 0 : i32
    %c0_i32_1 = arith.constant 0 : i32
    return %arg0, %c0_i32, %c0_i32_0 : i32, i32, i32
  }
  func.func @transform_3(%arg0: i32, %arg1: i32) -> (i32, i32) {
    %c0_i32 = arith.constant 0 : i32
    %c0_i32_0 = arith.constant 0 : i32
    %c0_i32_1 = arith.constant 0 : i32
    return %c0_i32, %c0_i32_0 : i32, i32
  }
  func.func @transform_4(%arg0: i32, %arg1: i32) -> (i32, i32) {
    %c0_i32 = arith.constant 0 : i32
    %c0_i32_0 = arith.constant 0 : i32
    %c0_i32_1 = arith.constant 0 : i32
    return %c0_i32, %c0_i32_0 : i32, i32
  }
  func.func @transform_5(%arg0: i32, %arg1: i32) -> (i32, i32, i32) {
    %c0_i32 = arith.constant 0 : i32
    %c0_i32_0 = arith.constant 0 : i32
    %c0_i32_1 = arith.constant 0 : i32
    return %arg0, %c0_i32, %c0_i32_0 : i32, i32, i32
  }
}

</mosaic_0001>

<llo_original>
// kernel: tpu_custom_call.1
$region0: #{tpu_custom_call.1}
  #allocation0 [shape = 'u32[]', space=smem, size = 0x4, offset = 0x4, fixed_abs, tag = 'smem constant byte address 0x4 - core index']
  #allocation1 [shape = 'u32[72,128]{1,0:T(1,128)}', space=vmem, size = 0x9000, scoped, tag = 'internal scratch']
  #allocation2 [shape = 'f32[256,128]{1,0:T(8,128)}', space=vmem, size = 0x20000, scoped, tag = 'scratch operand']
  #allocation3 [shape = 'f32[256,1]{1,0:T(8,128)}', space=vmem, size = 0x20000, scoped, tag = 'scratch operand']
  %s0 = inlined_call_operand.vmem [shape: f32[2,256,32], index: 0, kind: input, shape index: {}]
  %s1 = inlined_call_operand.vmem [shape: f32[2,256,256], index: 1, kind: input, shape index: {}]
  %s2 = inlined_call_operand.vmem [shape: f32[2,256,1], index: 2, kind: input, shape index: {}]
  %s3 = inlined_call_operand.vmem [shape: f32[32,128], index: 3, kind: input, shape index: {}]
  %s4 = inlined_call_operand.vmem [shape: f32[32,160], index: 4, kind: input, shape index: {}]
  %s5 = inlined_call_operand.vmem [shape: f32[2,256,32], index: 5, kind: output, shape index: {}]
  %s6 = sld [smem:[#allocation0]]
  $region68: #{tpu_custom_call.1} parent=0
    _
  %s8 = ssub.s32 1, %s6
  %s9 = scalar_select 0, %s8, %s6
  loop: start=0, step=1, limit=6
  $region2: #{tpu_custom_call.1} parent=0 // loop_pre_header
    _
  $region3: #{tpu_custom_call.1} parent=0 // loop_header
    %s11 = sphi 0, %s15
    %p12 = scmp.ge.s32.totalorder %s11, 6
    %s18 = sphi 0, %s30
    %s19 = sphi 0, %s26
    %s20 = sphi 0, %s18
    %s21 = sphi 0, %s19
    %s22 = sphi 0, %s20
    %s23 = sphi 0, %s21
    %s33 = sphi 0, %s35
    %s36 = sphi 0, %s33
    %s37 = sphi 0, %s36
    %s53 = sphi 0, %s37
    %s61 = sphi 0, %s63
    %s64 = sphi 0, %s61
    %s65 = sphi 0, %s64
    %s81 = sphi 0, %s65
    %s87 = sphi 0, %s89
    %s90 = sphi 0, %s87
    %s91 = sphi 0, %s90
    %s107 = sphi 0, %s91
    %s111 = sphi 0, %s111
    %s113 = sphi 0, %s111
    %s114 = sphi 0, %s113
    %s128 = sphi 0, %s114
    %s132 = sphi 0, %s132
    %s134 = sphi 0, %s132
    %s135 = sphi 0, %s134
    %s149 = sphi 0, %s135
    %s155 = sphi 0, %s157
    %s158 = sphi 0, %s155
    %s159 = sphi 0, %s158
    %s175 = sphi 0, %s159
  $region4: #{tpu_custom_call.1} parent=0 // loop_header_branch
    %14 = sbr.rel (%p12) target = $region8
  $region5: #{tpu_custom_call.1} parent=0 // loop_body
    %s16 = ssub.s32 %s11, 1
    %s17 = ssub.s32 %s11, 2
    %s24 = sadd.s32 1, %s19
    %p25 = scmp.ge.s32.totalorder %s24, 2
    %s26 = scalar_select %p25, 0, %s24
    %s27 = sadd.s32 1, %s18
    %s28 = scalar_select %p25, %s27, %s18
    %p29 = scmp.ge.s32.totalorder %s28, 2
    %s30 = scalar_select %p29, 0, %s28
    %s31 = ssub.s32 %s18, %s30
    %p32 = scmp.eq.s32.totalorder %s31, 0
    %s34 = sadd.s32 %s33, 1
    %s35 = scalar_select %p32, %s33, %s34
    %p38 = pneg %p32
    %p39 = scmp.eq.s32.totalorder %s11, 3
    %p40 = por %p38, %p39
    %p41 = scmp.ne.s32.totalorder %s33, %s36
    %p42 = scmp.eq.s32.totalorder %s11, 0
    %p43 = por %p41, %p42
    %p44 = scmp.ne.s32.totalorder %s33, %s36
    %p45 = scmp.eq.s32.totalorder %s16, 3
    %p46 = por %p44, %p45
    %p47 = scmp.ne.s32.totalorder %s36, %s37
    %p48 = scmp.eq.s32.totalorder %s16, 0
    %p49 = por %p47, %p48
    %p50 = scmp.ne.s32.totalorder %s36, %s37
    %p51 = scmp.eq.s32.totalorder %s17, 3
    %p52 = por %p50, %p51
    %p54 = scmp.ne.s32.totalorder %s37, %s53
    %p55 = scmp.eq.s32.totalorder %s17, 0
    %p56 = por %p54, %p55
    %s57 = ssub.s32 %s18, %s30
    %s58 = ssub.s32 %s19, %s26
    %s59 = sor.u32 %s57, %s58
    %p60 = scmp.eq.s32.totalorder %s59, 0
    %s62 = sadd.s32 %s61, 1
    %s63 = scalar_select %p60, %s61, %s62
    %p66 = pneg %p60
    %p67 = scmp.eq.s32.totalorder %s11, 3
    %p68 = por %p66, %p67
    %p69 = scmp.ne.s32.totalorder %s61, %s64
    %p70 = scmp.eq.s32.totalorder %s11, 0
    %p71 = por %p69, %p70
    %p72 = scmp.ne.s32.totalorder %s61, %s64
    %p73 = scmp.eq.s32.totalorder %s16, 3
    %p74 = por %p72, %p73
    %p75 = scmp.ne.s32.totalorder %s64, %s65
    %p76 = scmp.eq.s32.totalorder %s16, 0
    %p77 = por %p75, %p76
    %p78 = scmp.ne.s32.totalorder %s64, %s65
    %p79 = scmp.eq.s32.totalorder %s17, 3
    %p80 = por %p78, %p79
    %p82 = scmp.ne.s32.totalorder %s65, %s81
    %p83 = scmp.eq.s32.totalorder %s17, 0
    %p84 = por %p82, %p83
    %s85 = ssub.s32 %s18, %s30
    %p86 = scmp.eq.s32.totalorder %s85, 0
    %s88 = sadd.s32 %s87, 1
    %s89 = scalar_select %p86, %s87, %s88
    %p92 = pneg %p86
    %p93 = scmp.eq.s32.totalorder %s11, 3
    %p94 = por %p92, %p93
    %p95 = scmp.ne.s32.totalorder %s87, %s90
    %p96 = scmp.eq.s32.totalorder %s11, 0
    %p97 = por %p95, %p96
    %p98 = scmp.ne.s32.totalorder %s87, %s90
    %p99 = scmp.eq.s32.totalorder %s16, 3
    %p100 = por %p98, %p99
    %p101 = scmp.ne.s32.totalorder %s90, %s91
    %p102 = scmp.eq.s32.totalorder %s16, 0
    %p103 = por %p101, %p102
    %p104 = scmp.ne.s32.totalorder %s90, %s91
    %p105 = scmp.eq.s32.totalorder %s17, 3
    %p106 = por %p104, %p105
    %p108 = scmp.ne.s32.totalorder %s91, %s107
    %p109 = scmp.eq.s32.totalorder %s17, 0
    %p110 = por %p108, %p109
    %s112 = sadd.s32 %s111, 1
    %p115 = scmp.eq.s32.totalorder %s11, 3
    %p116 = scmp.ne.s32.totalorder %s111, %s113
    %p117 = scmp.eq.s32.totalorder %s11, 0
    %p118 = por %p116, %p117
    %p119 = scmp.ne.s32.totalorder %s111, %s113
    %p120 = scmp.eq.s32.totalorder %s16, 3
    %p121 = por %p119, %p120
    %p122 = scmp.ne.s32.totalorder %s113, %s114
    %p123 = scmp.eq.s32.totalorder %s16, 0
    %p124 = por %p122, %p123
    %p125 = scmp.ne.s32.totalorder %s113, %s114
    %p126 = scmp.eq.s32.totalorder %s17, 3
    %p127 = por %p125, %p126
    %p129 = scmp.ne.s32.totalorder %s114, %s128
    %p130 = scmp.eq.s32.totalorder %s17, 0
    %p131 = por %p129, %p130
    %s133 = sadd.s32 %s132, 1
    %p136 = scmp.eq.s32.totalorder %s11, 3
    %p137 = scmp.ne.s32.totalorder %s132, %s134
    %p138 = scmp.eq.s32.totalorder %s11, 0
    %p139 = por %p137, %p138
    %p140 = scmp.ne.s32.totalorder %s132, %s134
    %p141 = scmp.eq.s32.totalorder %s16, 3
    %p142 = por %p140, %p141
    %p143 = scmp.ne.s32.totalorder %s134, %s135
    %p144 = scmp.eq.s32.totalorder %s16, 0
    %p145 = por %p143, %p144
    %p146 = scmp.ne.s32.totalorder %s134, %s135
    %p147 = scmp.eq.s32.totalorder %s17, 3
    %p148 = por %p146, %p147
    %p150 = scmp.ne.s32.totalorder %s135, %s149
    %p151 = scmp.eq.s32.totalorder %s17, 0
    %p152 = por %p150, %p151
    %s153 = ssub.s32 %s18, %s30
    %p154 = scmp.eq.s32.totalorder %s153, 0
    %s156 = sadd.s32 %s155, 1
    %s157 = scalar_select %p154, %s155, %s156
    %p160 = pneg %p154
    %p161 = scmp.eq.s32.totalorder %s11, 3
    %p162 = por %p160, %p161
    %p163 = scmp.ne.s32.totalorder %s155, %s158
    %p164 = scmp.eq.s32.totalorder %s11, 0
    %p165 = por %p163, %p164
    %p166 = scmp.ne.s32.totalorder %s155, %s158
    %p167 = scmp.eq.s32.totalorder %s16, 3
    %p168 = por %p166, %p167
    %p169 = scmp.ne.s32.totalorder %s158, %s159
    %p170 = scmp.eq.s32.totalorder %s16, 0
    %p171 = por %p169, %p170
    %p172 = scmp.ne.s32.totalorder %s158, %s159
    %p173 = scmp.eq.s32.totalorder %s17, 3
    %p174 = por %p172, %p173
    %p176 = scmp.ne.s32.totalorder %s159, %s175
    %p177 = scmp.eq.s32.totalorder %s17, 0
    %p178 = por %p176, %p177
    %p179 = scmp.le.s32.totalorder 1, %s11
    %p180 = scmp.lt.s32.totalorder %s11, 5
    %p181 = pnand %p179, %p180
    %p182 = pneg %p181
    // Predicated region
    $region9: #{tpu_custom_call.1} parent=5 // pred_check
      _
    $region10: #{tpu_custom_call.1} parent=5 // pred_check_branch
      %184 = sbr.rel (%p181) target = $region12
    $region11: #{tpu_custom_call.1} parent=5 // pred_region
      %s185 = ssub.s32 %s11, 1
      // Predicated region
      $region13: #{tpu_custom_call.1} parent=11 // pred_check
        %p186 = pneg %p49
      $region14: #{tpu_custom_call.1} parent=11 // pred_check_branch
        %188 = sbr.rel (%p186) target = $region16
      $region15: #{tpu_custom_call.1} parent=11 // pred_region
        %p189 = scmp.lt.s32.totalorder %s20, 1
        %s190 = scalar_select %p189, %s20, 1
        %s191 = smul.addr %s190, 32
        %s192 = smul.addr %s191, 8
        %s193 = scalar_lea.vmem %s0, %s192
      $region16: #{tpu_custom_call.1} parent=11 // pred_fallthru
        _
      // Predicated region
      $region17: #{tpu_custom_call.1} parent=11 // pred_check
        %p194 = pneg %p103
      $region18: #{tpu_custom_call.1} parent=11 // pred_check_branch
        %196 = sbr.rel (%p194) target = $region20
      $region19: #{tpu_custom_call.1} parent=11 // pred_region
        %p197 = scmp.lt.s32.totalorder %s20, 1
        %s198 = scalar_select %p197, %s20, 1
        %s199 = smul.addr %s198, 32
        %s200 = smul.addr %s199, 8
        %s201 = scalar_lea.vmem %s2, %s200
      $region20: #{tpu_custom_call.1} parent=11 // pred_fallthru
        _
      // Predicated region
      $region21: #{tpu_custom_call.1} parent=11 // pred_check
        %p202 = pneg %p124
      $region22: #{tpu_custom_call.1} parent=11 // pred_check_branch
        %204 = sbr.rel (%p202) target = $region24
      $region23: #{tpu_custom_call.1} parent=11 // pred_region
        _
      $region24: #{tpu_custom_call.1} parent=11 // pred_fallthru
        _
      // Predicated region
      $region25: #{tpu_custom_call.1} parent=11 // pred_check
        %p205 = pneg %p145
      $region26: #{tpu_custom_call.1} parent=11 // pred_check_branch
        %207 = sbr.rel (%p205) target = $region28
      $region27: #{tpu_custom_call.1} parent=11 // pred_region
        _
      $region28: #{tpu_custom_call.1} parent=11 // pred_fallthru
        _
    $region12: #{tpu_custom_call.1} parent=5 // pred_fallthru
      _
    %p208 = scmp.lt.s32.totalorder %s11, 4
    // Predicated region
    $region29: #{tpu_custom_call.1} parent=5 // pred_check
      %p209 = pneg %p208
    $region30: #{tpu_custom_call.1} parent=5 // pred_check_branch
      %211 = sbr.rel (%p209) target = $region32
    $region31: #{tpu_custom_call.1} parent=5 // pred_region
      // Predicated region
      $region33: #{tpu_custom_call.1} parent=31 // pred_check
        %p212 = pneg %p71
      $region34: #{tpu_custom_call.1} parent=31 // pred_check_branch
        %214 = sbr.rel (%p212) target = $region36
      $region35: #{tpu_custom_call.1} parent=31 // pred_region
        %s215 = smul.u32 16, %s19
        %p216 = scmp.lt.s32.totalorder %s18, 1
        %s217 = scalar_select %p216, %s18, 1
        %p218 = scmp.lt.s32.totalorder %s215, 31
        %s219 = scalar_select %p218, %s215, 31
        %s220 = smul.addr %s219, 2
        %s221 = smul.addr %s217, 64
        %s222 = sadd.s32 %s220, %s221
        %s223 = smul.addr %s222, 8
        %s224 = scalar_lea.vmem %s1, %s223
        %s225 = smul.u32 16, %s19
      $region36: #{tpu_custom_call.1} parent=31 // pred_fallthru
        _
    $region32: #{tpu_custom_call.1} parent=5 // pred_fallthru
      _
    %p226 = scmp.le.s32.totalorder 1, %s11
    %p227 = scmp.lt.s32.totalorder %s11, 5
    %p228 = pnand %p226, %p227
    %p229 = pneg %p228
    // Predicated region
    $region37: #{tpu_custom_call.1} parent=5 // pred_check
      _
    $region38: #{tpu_custom_call.1} parent=5 // pred_check_branch
      %231 = sbr.rel (%p228) target = $region40
    $region39: #{tpu_custom_call.1} parent=5 // pred_region
      %s232 = ssub.s32 %s11, 1
      %p233 = scmp.lt.s32.totalorder %s20, 1
      %s234 = scalar_select %p233, %s20, 1
      %s235 = smul.addr %s234, 32
      %s236 = smul.addr %s235, 8
      %s237 = scalar_lea.vmem %s0, %s236
      %p238 = pneg %p49
      %p239 = pneg %p46
      %s240 = smul.u32 16, %s21
      %p241 = scmp.lt.s32.totalorder %s20, 1
      %s242 = scalar_select %p241, %s20, 1
      %p243 = scmp.lt.s32.totalorder %s240, 31
      %s244 = scalar_select %p243, %s240, 31
      %s245 = smul.addr %s244, 2
      %s246 = smul.addr %s242, 64
      %s247 = sadd.s32 %s245, %s246
      %s248 = smul.addr %s247, 8
      %s249 = scalar_lea.vmem %s1, %s248
      %p250 = pneg %p77
      %p251 = pneg %p74
      %p252 = scmp.lt.s32.totalorder %s20, 1
      %s253 = scalar_select %p252, %s20, 1
      %s254 = smul.addr %s253, 32
      %s255 = smul.addr %s254, 8
      %s256 = scalar_lea.vmem %s2, %s255
      %p257 = pneg %p103
      %p258 = pneg %p100
      %p259 = pneg %p124
      %p260 = pneg %p121
      %p261 = pneg %p145
      %p262 = pneg %p142
      %p263 = pneg %p171
      %p264 = pneg %p168
      %p265 = scmp.lt.s32.totalorder %s20, 1
      %s266 = scalar_select %p265, %s20, 1
      %s267 = smul.addr %s266, 32
      %s268 = smul.addr %s267, 8
      %s269 = scalar_lea.vmem %s5, %s268
      %p270 = scmp.lt.s32.totalorder %s20, 1
      %s271 = scalar_select %p270, %s20, 1
      %s272 = smul.addr %s271, 32
      %s273 = smul.addr %s272, 8
      %s274 = scalar_lea.vmem %s0, %s273
      %s275 = smul.u32 16, %s21
      %p276 = scmp.lt.s32.totalorder %s20, 1
      %s277 = scalar_select %p276, %s20, 1
      %p278 = scmp.lt.s32.totalorder %s275, 31
      %s279 = scalar_select %p278, %s275, 31
      %s280 = smul.addr %s279, 2
      %s281 = smul.addr %s277, 64
      %s282 = sadd.s32 %s280, %s281
      %s283 = smul.addr %s282, 8
      %s284 = scalar_lea.vmem %s1, %s283
      %s285 = smul.u32 16, %s21
      %p286 = scmp.lt.s32.totalorder %s20, 1
      %s287 = scalar_select %p286, %s20, 1
      %s288 = smul.addr %s287, 32
      %s289 = smul.addr %s288, 8
      %s290 = scalar_lea.vmem %s2, %s289
      %p291 = scmp.lt.s32.totalorder %s20, 1
      %s292 = scalar_select %p291, %s20, 1
      %s293 = smul.addr %s292, 32
      %s294 = smul.addr %s293, 8
      %s295 = scalar_lea.vmem %s5, %s294
      %p296 = scmp.eq.s32.totalorder %s21, 0
      // Predicated region
      $region41: #{tpu_custom_call.1} parent=39 // pred_check
        %p297 = pneg %p296
      $region42: #{tpu_custom_call.1} parent=39 // pred_check_branch
        %299 = sbr.rel (%p297) target = $region44
      $region43: #{tpu_custom_call.1} parent=39 // pred_region
        %v300 = vld [vmem:[%s3] sm:$0xff]
        %v301 = vld [vmem:[%s3 + $0x8] sm:$0xff]
        %v302 = vld [vmem:[%s3 + $0x10] sm:$0xff]
        %v303 = vld [vmem:[%s3 + $0x18] sm:$0xff]
        loop: start=0, step=1, limit=2
        $region45: #{tpu_custom_call.1} parent=43 // loop_pre_header
          _
        $region46: #{tpu_custom_call.1} parent=43 // loop_header
          %s305 = sphi 0, %s309
          %p306 = scmp.ge.s32.totalorder %s305, 2
        $region47: #{tpu_custom_call.1} parent=43 // loop_header_branch
          %308 = sbr.rel (%p306) target = $region51
        $region48: #{tpu_custom_call.1} parent=43 // loop_body
          %s310 = smul.u32 %s305, 128
          %s311 = scalar_lea.vmem %s274, %s310
          %v312 = vld [vmem:[%s311] sm:$0xff]
          %v313 = vld [vmem:[%s311 + $0x8] sm:$0xff]
          %v314 = vld [vmem:[%s311 + $0x10] sm:$0xff]
          %v315 = vld [vmem:[%s311 + $0x18] sm:$0xff]
          %v316 = vld [vmem:[%s311 + $0x20] sm:$0xff]
          %v317 = vld [vmem:[%s311 + $0x28] sm:$0xff]
          %v318 = vld [vmem:[%s311 + $0x30] sm:$0xff]
          %v319 = vld [vmem:[%s311 + $0x38] sm:$0xff]
          %v320 = vld [vmem:[%s311 + $0x40] sm:$0xff]
          %v321 = vld [vmem:[%s311 + $0x48] sm:$0xff]
          %v322 = vld [vmem:[%s311 + $0x50] sm:$0xff]
          %v323 = vld [vmem:[%s311 + $0x58] sm:$0xff]
          %v324 = vld [vmem:[%s311 + $0x60] sm:$0xff]
          %v325 = vld [vmem:[%s311 + $0x68] sm:$0xff]
          %v326 = vld [vmem:[%s311 + $0x70] sm:$0xff]
          %v327 = vld [vmem:[%s311 + $0x78] sm:$0xff]
          %vm328 = vcmask 261120
          %v330 = vsel %vm328, %v312, 0
          %v333 = vsel %vm328, %v313, 0
          %v336 = vsel %vm328, %v314, 0
          %v339 = vsel %vm328, %v315, 0
          %v342 = vsel %vm328, %v316, 0
          %v345 = vsel %vm328, %v317, 0
          %v348 = vsel %vm328, %v318, 0
          %v351 = vsel %vm328, %v319, 0
          %v354 = vsel %vm328, %v320, 0
          %v357 = vsel %vm328, %v321, 0
          %v360 = vsel %vm328, %v322, 0
          %v363 = vsel %vm328, %v323, 0
          %v366 = vsel %vm328, %v324, 0
          %v369 = vsel %vm328, %v325, 0
          %v372 = vsel %vm328, %v326, 0
          %v375 = vsel %vm328, %v327, 0
          %377 = vmatpush.msra.mxu0 0.0
          %378 = vmatpush.msra.mxu0 0.0
          %379 = vmatpush.msra.mxu0 0.0
          %380 = vmatpush.msra.mxu0 0.0
          %381 = vmatpush.msra.mxu0 0.0
          %382 = vmatpush.msra.mxu0 0.0
          %383 = vmatpush.msra.mxu0 0.0
          %384 = vmatpush.msra.mxu0 0.0
          %385 = vmatpush.msra.mxu0 0.0
          %386 = vmatpush.msra.mxu0 0.0
          %387 = vmatpush.msra.mxu0 0.0
          %388 = vmatpush.msra.mxu0 0.0
          %389 = vmatpush.msra.mxu0 %v303
          %390 = vmatpush.msra.mxu0 %v302
          %391 = vmatpush.msra.mxu0 %v301
          %392 = vmatpush.msra.mxu0 %v300
          %393 = vmatmul.f32.gmra.mxu0 %v330
          %v394 = vpop.f32.mrf.mxu0
          %v395 = vadd.f32 0.0, %v394
          %396 = vmatmul.f32.gmra.mxu0 %v333
          %v397 = vpop.f32.mrf.mxu0
          %v398 = vadd.f32 0.0, %v397
          %399 = vmatmul.f32.gmra.mxu0 %v336
          %v400 = vpop.f32.mrf.mxu0
          %v401 = vadd.f32 0.0, %v400
          %402 = vmatmul.f32.gmra.mxu0 %v339
          %v403 = vpop.f32.mrf.mxu0
          %v404 = vadd.f32 0.0, %v403
          %405 = vmatmul.f32.gmra.mxu0 %v342
          %v406 = vpop.f32.mrf.mxu0
          %v407 = vadd.f32 0.0, %v406
          %408 = vmatmul.f32.gmra.mxu0 %v345
          %v409 = vpop.f32.mrf.mxu0
          %v410 = vadd.f32 0.0, %v409
          %411 = vmatmul.f32.gmra.mxu0 %v348
          %v412 = vpop.f32.mrf.mxu0
          %v413 = vadd.f32 0.0, %v412
          %414 = vmatmul.f32.gmra.mxu0 %v351
          %v415 = vpop.f32.mrf.mxu0
          %v416 = vadd.f32 0.0, %v415
          %417 = vmatmul.f32.gmra.mxu0 %v354
          %v418 = vpop.f32.mrf.mxu0
          %v419 = vadd.f32 0.0, %v418
          %420 = vmatmul.f32.gmra.mxu0 %v357
          %v421 = vpop.f32.mrf.mxu0
          %v422 = vadd.f32 0.0, %v421
          %423 = vmatmul.f32.gmra.mxu0 %v360
          %v424 = vpop.f32.mrf.mxu0
          %v425 = vadd.f32 0.0, %v424
          %426 = vmatmul.f32.gmra.mxu0 %v363
          %v427 = vpop.f32.mrf.mxu0
          %v428 = vadd.f32 0.0, %v427
          %429 = vmatmul.f32.gmra.mxu0 %v366
          %v430 = vpop.f32.mrf.mxu0
          %v431 = vadd.f32 0.0, %v430
          %432 = vmatmul.f32.gmra.mxu0 %v369
          %v433 = vpop.f32.mrf.mxu0
          %v434 = vadd.f32 0.0, %v433
          %435 = vmatmul.f32.gmra.mxu0 %v372
          %v436 = vpop.f32.mrf.mxu0
          %v437 = vadd.f32 0.0, %v436
          %438 = vmatmul.f32.gmra.mxu0 %v375
          %v439 = vpop.f32.mrf.mxu0
          %v440 = vadd.f32 0.0, %v439
          %441 = vdwg.mxu0
          %s442 = scalar_lea.vmem %s290, %s310
          %v443 = vld [vmem:[%s442] sm:$0xff]
          %v444 = vld [vmem:[%s442 + $0x8] sm:$0xff]
          %v445 = vld [vmem:[%s442 + $0x10] sm:$0xff]
          %v446 = vld [vmem:[%s442 + $0x18] sm:$0xff]
          %v447 = vld [vmem:[%s442 + $0x20] sm:$0xff]
          %v448 = vld [vmem:[%s442 + $0x28] sm:$0xff]
          %v449 = vld [vmem:[%s442 + $0x30] sm:$0xff]
          %v450 = vld [vmem:[%s442 + $0x38] sm:$0xff]
          %v451 = vld [vmem:[%s442 + $0x40] sm:$0xff]
          %v452 = vld [vmem:[%s442 + $0x48] sm:$0xff]
          %v453 = vld [vmem:[%s442 + $0x50] sm:$0xff]
          %v454 = vld [vmem:[%s442 + $0x58] sm:$0xff]
          %v455 = vld [vmem:[%s442 + $0x60] sm:$0xff]
          %v456 = vld [vmem:[%s442 + $0x68] sm:$0xff]
          %v457 = vld [vmem:[%s442 + $0x70] sm:$0xff]
          %v458 = vld [vmem:[%s442 + $0x78] sm:$0xff]
          %460 = vset.pattern.permute.xlu0 0
          %461 = vperm.xlu0 %460, %v443
          %v462 = vpop.permute.xlu0 %461
          %465 = vset.pattern.permute.xlu0 0
          %466 = vperm.xlu0 %465, %v444
          %v467 = vpop.permute.xlu0 %466
          %470 = vset.pattern.permute.xlu0 0
          %471 = vperm.xlu0 %470, %v445
          %v472 = vpop.permute.xlu0 %471
          %475 = vset.pattern.permute.xlu0 0
          %476 = vperm.xlu0 %475, %v446
          %v477 = vpop.permute.xlu0 %476
          %480 = vset.pattern.permute.xlu0 0
          %481 = vperm.xlu0 %480, %v447
          %v482 = vpop.permute.xlu0 %481
          %485 = vset.pattern.permute.xlu0 0
          %486 = vperm.xlu0 %485, %v448
          %v487 = vpop.permute.xlu0 %486
          %490 = vset.pattern.permute.xlu0 0
          %491 = vperm.xlu0 %490, %v449
          %v492 = vpop.permute.xlu0 %491
          %495 = vset.pattern.permute.xlu0 0
          %496 = vperm.xlu0 %495, %v450
          %v497 = vpop.permute.xlu0 %496
          %500 = vset.pattern.permute.xlu0 0
          %501 = vperm.xlu0 %500, %v451
          %v502 = vpop.permute.xlu0 %501
          %505 = vset.pattern.permute.xlu0 0
          %506 = vperm.xlu0 %505, %v452
          %v507 = vpop.permute.xlu0 %506
          %510 = vset.pattern.permute.xlu0 0
          %511 = vperm.xlu0 %510, %v453
          %v512 = vpop.permute.xlu0 %511
          %515 = vset.pattern.permute.xlu0 0
          %516 = vperm.xlu0 %515, %v454
          %v517 = vpop.permute.xlu0 %516
          %520 = vset.pattern.permute.xlu0 0
          %521 = vperm.xlu0 %520, %v455
          %v522 = vpop.permute.xlu0 %521
          %525 = vset.pattern.permute.xlu0 0
          %526 = vperm.xlu0 %525, %v456
          %v527 = vpop.permute.xlu0 %526
          %530 = vset.pattern.permute.xlu0 0
          %531 = vperm.xlu0 %530, %v457
          %v532 = vpop.permute.xlu0 %531
          %535 = vset.pattern.permute.xlu0 0
          %536 = vperm.xlu0 %535, %v458
          %v537 = vpop.permute.xlu0 %536
          %v539 = vmul.f32 %v462, %v395
          %v540 = vmul.f32 %v467, %v398
          %v541 = vmul.f32 %v472, %v401
          %v542 = vmul.f32 %v477, %v404
          %v543 = vmul.f32 %v482, %v407
          %v544 = vmul.f32 %v487, %v410
          %v545 = vmul.f32 %v492, %v413
          %v546 = vmul.f32 %v497, %v416
          %v547 = vmul.f32 %v502, %v419
          %v548 = vmul.f32 %v507, %v422
          %v549 = vmul.f32 %v512, %v425
          %v550 = vmul.f32 %v517, %v428
          %v551 = vmul.f32 %v522, %v431
          %v552 = vmul.f32 %v527, %v434
          %v553 = vmul.f32 %v532, %v437
          %v554 = vmul.f32 %v537, %v440
          %s555 = scalar_lea.vmem [#allocation2], %s310
          %556 = vst [vmem:[%s555] sm:$0xff] %v539
          %557 = vst [vmem:[%s555 + $0x8] sm:$0xff] %v540
          %558 = vst [vmem:[%s555 + $0x10] sm:$0xff] %v541
          %559 = vst [vmem:[%s555 + $0x18] sm:$0xff] %v542
          %560 = vst [vmem:[%s555 + $0x20] sm:$0xff] %v543
          %561 = vst [vmem:[%s555 + $0x28] sm:$0xff] %v544
          %562 = vst [vmem:[%s555 + $0x30] sm:$0xff] %v545
          %563 = vst [vmem:[%s555 + $0x38] sm:$0xff] %v546
          %564 = vst [vmem:[%s555 + $0x40] sm:$0xff] %v547
          %565 = vst [vmem:[%s555 + $0x48] sm:$0xff] %v548
          %566 = vst [vmem:[%s555 + $0x50] sm:$0xff] %v549
          %567 = vst [vmem:[%s555 + $0x58] sm:$0xff] %v550
          %568 = vst [vmem:[%s555 + $0x60] sm:$0xff] %v551
          %569 = vst [vmem:[%s555 + $0x68] sm:$0xff] %v552
          %570 = vst [vmem:[%s555 + $0x70] sm:$0xff] %v553
          %571 = vst [vmem:[%s555 + $0x78] sm:$0xff] %v554
        $region49: #{tpu_custom_call.1} parent=43 // loop_footer
          %s309 = sadd.s32 1, %s305
        $region50: #{tpu_custom_call.1} parent=43 // loop_footer_branch
          %304 = sbr.rel target = $region46
        $region51: #{tpu_custom_call.1} parent=43 // loop_exit
          _
      $region44: #{tpu_custom_call.1} parent=39 // pred_fallthru
        _
      %s572 = smul.u32 %s21, 128
      %v573 = vld [vmem:[%s284] sm:$0xff]
      %v574 = vld [vmem:[%s284 + $0x8] sm:$0xff]
      %v575 = vld [vmem:[%s284 + $0x10] sm:$0xff]
      %v576 = vld [vmem:[%s284 + $0x18] sm:$0xff]
      %v577 = vld [vmem:[%s284 + $0x20] sm:$0xff]
      %v578 = vld [vmem:[%s284 + $0x28] sm:$0xff]
      %v579 = vld [vmem:[%s284 + $0x30] sm:$0xff]
      %v580 = vld [vmem:[%s284 + $0x38] sm:$0xff]
      %v581 = vld [vmem:[%s284 + $0x40] sm:$0xff]
      %v582 = vld [vmem:[%s284 + $0x48] sm:$0xff]
      %v583 = vld [vmem:[%s284 + $0x50] sm:$0xff]
      %v584 = vld [vmem:[%s284 + $0x58] sm:$0xff]
      %v585 = vld [vmem:[%s284 + $0x60] sm:$0xff]
      %v586 = vld [vmem:[%s284 + $0x68] sm:$0xff]
      %v587 = vld [vmem:[%s284 + $0x70] sm:$0xff]
      %v588 = vld [vmem:[%s284 + $0x78] sm:$0xff]
      %v589 = vld [vmem:[%s284 + $0x80] sm:$0xff]
      %v590 = vld [vmem:[%s284 + $0x88] sm:$0xff]
      %v591 = vld [vmem:[%s284 + $0x90] sm:$0xff]
      %v592 = vld [vmem:[%s284 + $0x98] sm:$0xff]
      %v593 = vld [vmem:[%s284 + $0xa0] sm:$0xff]
      %v594 = vld [vmem:[%s284 + $0xa8] sm:$0xff]
      %v595 = vld [vmem:[%s284 + $0xb0] sm:$0xff]
      %v596 = vld [vmem:[%s284 + $0xb8] sm:$0xff]
      %v597 = vld [vmem:[%s284 + $0xc0] sm:$0xff]
      %v598 = vld [vmem:[%s284 + $0xc8] sm:$0xff]
      %v599 = vld [vmem:[%s284 + $0xd0] sm:$0xff]
      %v600 = vld [vmem:[%s284 + $0xd8] sm:$0xff]
      %v601 = vld [vmem:[%s284 + $0xe0] sm:$0xff]
      %v602 = vld [vmem:[%s284 + $0xe8] sm:$0xff]
      %v603 = vld [vmem:[%s284 + $0xf0] sm:$0xff]
      %v604 = vld [vmem:[%s284 + $0xf8] sm:$0xff]
      %v605 = vld [vmem:[#allocation2] sm:$0xff]
      %v606 = vld [vmem:[#allocation2 + $0x8] sm:$0xff]
      %v607 = vld [vmem:[#allocation2 + $0x10] sm:$0xff]
      %v608 = vld [vmem:[#allocation2 + $0x18] sm:$0xff]
      %v609 = vld [vmem:[#allocation2 + $0x20] sm:$0xff]
      %v610 = vld [vmem:[#allocation2 + $0x28] sm:$0xff]
      %v611 = vld [vmem:[#allocation2 + $0x30] sm:$0xff]
      %v612 = vld [vmem:[#allocation2 + $0x38] sm:$0xff]
      %v613 = vld [vmem:[#allocation2 + $0x40] sm:$0xff]
      %v614 = vld [vmem:[#allocation2 + $0x48] sm:$0xff]
      %v615 = vld [vmem:[#allocation2 + $0x50] sm:$0xff]
      %v616 = vld [vmem:[#allocation2 + $0x58] sm:$0xff]
      %v617 = vld [vmem:[#allocation2 + $0x60] sm:$0xff]
      %v618 = vld [vmem:[#allocation2 + $0x68] sm:$0xff]
      %v619 = vld [vmem:[#allocation2 + $0x70] sm:$0xff]
      %v620 = vld [vmem:[#allocation2 + $0x78] sm:$0xff]
      %v621 = vld [vmem:[#allocation2 + $0x80] sm:$0xff]
      %v622 = vld [vmem:[#allocation2 + $0x88] sm:$0xff]
      %v623 = vld [vmem:[#allocation2 + $0x90] sm:$0xff]
      %v624 = vld [vmem:[#allocation2 + $0x98] sm:$0xff]
      %v625 = vld [vmem:[#allocation2 + $0xa0] sm:$0xff]
      %v626 = vld [vmem:[#allocation2 + $0xa8] sm:$0xff]
      %v627 = vld [vmem:[#allocation2 + $0xb0] sm:$0xff]
      %v628 = vld [vmem:[#allocation2 + $0xb8] sm:$0xff]
      %v629 = vld [vmem:[#allocation2 + $0xc0] sm:$0xff]
      %v630 = vld [vmem:[#allocation2 + $0xc8] sm:$0xff]
      %v631 = vld [vmem:[#allocation2 + $0xd0] sm:$0xff]
      %v632 = vld [vmem:[#allocation2 + $0xd8] sm:$0xff]
      %v633 = vld [vmem:[#allocation2 + $0xe0] sm:$0xff]
      %v634 = vld [vmem:[#allocation2 + $0xe8] sm:$0xff]
      %v635 = vld [vmem:[#allocation2 + $0xf0] sm:$0xff]
      %v636 = vld [vmem:[#allocation2 + $0xf8] sm:$0xff]
      %637 = vmatpush.msra.mxu0 %v620
      %638 = vmatpush.msra.mxu0 %v619
      %639 = vmatpush.msra.mxu0 %v618
      %640 = vmatpush.msra.mxu0 %v617
      %641 = vmatpush.msra.mxu0 %v616
      %642 = vmatpush.msra.mxu0 %v615
      %643 = vmatpush.msra.mxu0 %v614
      %644 = vmatpush.msra.mxu0 %v613
      %645 = vmatpush.msra.mxu0 %v612
      %646 = vmatpush.msra.mxu0 %v611
      %647 = vmatpush.msra.mxu0 %v610
      %648 = vmatpush.msra.mxu0 %v609
      %649 = vmatpush.msra.mxu0 %v608
      %650 = vmatpush.msra.mxu0 %v607
      %651 = vmatpush.msra.mxu0 %v606
      %652 = vmatpush.msra.mxu0 %v605
      %653 = vmatmul.f32.gmra.mxu0 %v573
      %v654 = vpop.f32.mrf.mxu0
      %v655 = vadd.f32 0.0, %v654
      %656 = vmatmul.f32.gmra.mxu0 %v575
      %v657 = vpop.f32.mrf.mxu0
      %v658 = vadd.f32 0.0, %v657
      %659 = vmatmul.f32.gmra.mxu0 %v577
      %v660 = vpop.f32.mrf.mxu0
      %v661 = vadd.f32 0.0, %v660
      %662 = vmatmul.f32.gmra.mxu0 %v579
      %v663 = vpop.f32.mrf.mxu0
      %v664 = vadd.f32 0.0, %v663
      %665 = vmatmul.f32.gmra.mxu0 %v581
      %v666 = vpop.f32.mrf.mxu0
      %v667 = vadd.f32 0.0, %v666
      %668 = vmatmul.f32.gmra.mxu0 %v583
      %v669 = vpop.f32.mrf.mxu0
      %v670 = vadd.f32 0.0, %v669
      %671 = vmatmul.f32.gmra.mxu0 %v585
      %v672 = vpop.f32.mrf.mxu0
      %v673 = vadd.f32 0.0, %v672
      %674 = vmatmul.f32.gmra.mxu0 %v587
      %v675 = vpop.f32.mrf.mxu0
      %v676 = vadd.f32 0.0, %v675
      %677 = vmatmul.f32.gmra.mxu0 %v589
      %v678 = vpop.f32.mrf.mxu0
      %v679 = vadd.f32 0.0, %v678
      %680 = vmatmul.f32.gmra.mxu0 %v591
      %v681 = vpop.f32.mrf.mxu0
      %v682 = vadd.f32 0.0, %v681
      %683 = vmatmul.f32.gmra.mxu0 %v593
      %v684 = vpop.f32.mrf.mxu0
      %v685 = vadd.f32 0.0, %v684
      %686 = vmatmul.f32.gmra.mxu0 %v595
      %v687 = vpop.f32.mrf.mxu0
      %v688 = vadd.f32 0.0, %v687
      %689 = vmatmul.f32.gmra.mxu0 %v597
      %v690 = vpop.f32.mrf.mxu0
      %v691 = vadd.f32 0.0, %v690
      %692 = vmatmul.f32.gmra.mxu0 %v599
      %v693 = vpop.f32.mrf.mxu0
      %v694 = vadd.f32 0.0, %v693
      %695 = vmatmul.f32.gmra.mxu0 %v601
      %v696 = vpop.f32.mrf.mxu0
      %v697 = vadd.f32 0.0, %v696
      %698 = vmatmul.f32.gmra.mxu0 %v603
      %v699 = vpop.f32.mrf.mxu0
      %v700 = vadd.f32 0.0, %v699
      %701 = vdwg.mxu0
      %702 = vmatpush.msra.mxu0 %v636
      %703 = vmatpush.msra.mxu0 %v635
      %704 = vmatpush.msra.mxu0 %v634
      %705 = vmatpush.msra.mxu0 %v633
      %706 = vmatpush.msra.mxu0 %v632
      %707 = vmatpush.msra.mxu0 %v631
      %708 = vmatpush.msra.mxu0 %v630
      %709 = vmatpush.msra.mxu0 %v629
      %710 = vmatpush.msra.mxu0 %v628
      %711 = vmatpush.msra.mxu0 %v627
      %712 = vmatpush.msra.mxu0 %v626
      %713 = vmatpush.msra.mxu0 %v625
      %714 = vmatpush.msra.mxu0 %v624
      %715 = vmatpush.msra.mxu0 %v623
      %716 = vmatpush.msra.mxu0 %v622
      %717 = vmatpush.msra.mxu0 %v621
      %718 = vmatmul.f32.gmra.mxu0 %v574
      %v719 = vpop.f32.mrf.mxu0
      %v720 = vadd.f32 %v655, %v719
      %721 = vmatmul.f32.gmra.mxu0 %v576
      %v722 = vpop.f32.mrf.mxu0
      %v723 = vadd.f32 %v658, %v722
      %724 = vmatmul.f32.gmra.mxu0 %v578
      %v725 = vpop.f32.mrf.mxu0
      %v726 = vadd.f32 %v661, %v725
      %727 = vmatmul.f32.gmra.mxu0 %v580
      %v728 = vpop.f32.mrf.mxu0
      %v729 = vadd.f32 %v664, %v728
      %730 = vmatmul.f32.gmra.mxu0 %v582
      %v731 = vpop.f32.mrf.mxu0
      %v732 = vadd.f32 %v667, %v731
      %733 = vmatmul.f32.gmra.mxu0 %v584
      %v734 = vpop.f32.mrf.mxu0
      %v735 = vadd.f32 %v670, %v734
      %736 = vmatmul.f32.gmra.mxu0 %v586
      %v737 = vpop.f32.mrf.mxu0
      %v738 = vadd.f32 %v673, %v737
      %739 = vmatmul.f32.gmra.mxu0 %v588
      %v740 = vpop.f32.mrf.mxu0
      %v741 = vadd.f32 %v676, %v740
      %742 = vmatmul.f32.gmra.mxu0 %v590
      %v743 = vpop.f32.mrf.mxu0
      %v744 = vadd.f32 %v679, %v743
      %745 = vmatmul.f32.gmra.mxu0 %v592
      %v746 = vpop.f32.mrf.mxu0
      %v747 = vadd.f32 %v682, %v746
      %748 = vmatmul.f32.gmra.mxu0 %v594
      %v749 = vpop.f32.mrf.mxu0
      %v750 = vadd.f32 %v685, %v749
      %751 = vmatmul.f32.gmra.mxu0 %v596
      %v752 = vpop.f32.mrf.mxu0
      %v753 = vadd.f32 %v688, %v752
      %754 = vmatmul.f32.gmra.mxu0 %v598
      %v755 = vpop.f32.mrf.mxu0
      %v756 = vadd.f32 %v691, %v755
      %757 = vmatmul.f32.gmra.mxu0 %v600
      %v758 = vpop.f32.mrf.mxu0
      %v759 = vadd.f32 %v694, %v758
      %760 = vmatmul.f32.gmra.mxu0 %v602
      %v761 = vpop.f32.mrf.mxu0
      %v762 = vadd.f32 %v697, %v761
      %763 = vmatmul.f32.gmra.mxu0 %v604
      %v764 = vpop.f32.mrf.mxu0
      %v765 = vadd.f32 %v700, %v764
      %766 = vdwg.mxu0
      %s767 = scalar_lea.vmem %s274, %s572
      %v768 = vld [vmem:[%s767] sm:$0xff]
      %v769 = vld [vmem:[%s767 + $0x8] sm:$0xff]
      %v770 = vld [vmem:[%s767 + $0x10] sm:$0xff]
      %v771 = vld [vmem:[%s767 + $0x18] sm:$0xff]
      %v772 = vld [vmem:[%s767 + $0x20] sm:$0xff]
      %v773 = vld [vmem:[%s767 + $0x28] sm:$0xff]
      %v774 = vld [vmem:[%s767 + $0x30] sm:$0xff]
      %v775 = vld [vmem:[%s767 + $0x38] sm:$0xff]
      %v776 = vld [vmem:[%s767 + $0x40] sm:$0xff]
      %v777 = vld [vmem:[%s767 + $0x48] sm:$0xff]
      %v778 = vld [vmem:[%s767 + $0x50] sm:$0xff]
      %v779 = vld [vmem:[%s767 + $0x58] sm:$0xff]
      %v780 = vld [vmem:[%s767 + $0x60] sm:$0xff]
      %v781 = vld [vmem:[%s767 + $0x68] sm:$0xff]
      %v782 = vld [vmem:[%s767 + $0x70] sm:$0xff]
      %v783 = vld [vmem:[%s767 + $0x78] sm:$0xff]
      %v784 = vld [vmem:[%s4] sm:$0xff]
      %v785 = vld [vmem:[%s4 + $0x8] sm:$0xff]
      %v786 = vld [vmem:[%s4 + $0x10] sm:$0xff]
      %v787 = vld [vmem:[%s4 + $0x18] sm:$0xff]
      %v788 = vld [vmem:[%s4 + $0x20] sm:$0xff]
      %v789 = vld [vmem:[%s4 + $0x28] sm:$0xff]
      %v790 = vld [vmem:[%s4 + $0x30] sm:$0xff]
      %v791 = vld [vmem:[%s4 + $0x38] sm:$0xff]
      %vm792 = vcmask 261120
      %v794 = vsel %vm792, %v768, 0
      %v797 = vsel %vm792, %v769, 0
      %v800 = vsel %vm792, %v770, 0
      %v803 = vsel %vm792, %v771, 0
      %v806 = vsel %vm792, %v772, 0
      %v809 = vsel %vm792, %v773, 0
      %v812 = vsel %vm792, %v774, 0
      %v815 = vsel %vm792, %v775, 0
      %v818 = vsel %vm792, %v776, 0
      %v821 = vsel %vm792, %v777, 0
      %v824 = vsel %vm792, %v778, 0
      %v827 = vsel %vm792, %v779, 0
      %v830 = vsel %vm792, %v780, 0
      %v833 = vsel %vm792, %v781, 0
      %v836 = vsel %vm792, %v782, 0
      %v839 = vsel %vm792, %v783, 0
      %841 = vmatpush.msra.mxu0 0.0
      %842 = vmatpush.msra.mxu0 0.0
      %843 = vmatpush.msra.mxu0 0.0
      %844 = vmatpush.msra.mxu0 0.0
      %845 = vmatpush.msra.mxu0 0.0
      %846 = vmatpush.msra.mxu0 0.0
      %847 = vmatpush.msra.mxu0 0.0
      %848 = vmatpush.msra.mxu0 0.0
      %849 = vmatpush.msra.mxu0 0.0
      %850 = vmatpush.msra.mxu0 0.0
      %851 = vmatpush.msra.mxu0 0.0
      %852 = vmatpush.msra.mxu0 0.0
      %853 = vmatpush.msra.mxu0 %v790
      %854 = vmatpush.msra.mxu0 %v788
      %855 = vmatpush.msra.mxu0 %v786
      %856 = vmatpush.msra.mxu0 %v784
      %857 = vmatmul.f32.gmra.mxu0 %v794
      %v858 = vpop.f32.mrf.mxu0
      %v859 = vadd.f32 0.0, %v858
      %860 = vmatmul.f32.gmra.mxu0 %v797
      %v861 = vpop.f32.mrf.mxu0
      %v862 = vadd.f32 0.0, %v861
      %863 = vmatmul.f32.gmra.mxu0 %v800
      %v864 = vpop.f32.mrf.mxu0
      %v865 = vadd.f32 0.0, %v864
      %866 = vmatmul.f32.gmra.mxu0 %v803
      %v867 = vpop.f32.mrf.mxu0
      %v868 = vadd.f32 0.0, %v867
      %869 = vmatmul.f32.gmra.mxu0 %v806
      %v870 = vpop.f32.mrf.mxu0
      %v871 = vadd.f32 0.0, %v870
      %872 = vmatmul.f32.gmra.mxu0 %v809
      %v873 = vpop.f32.mrf.mxu0
      %v874 = vadd.f32 0.0, %v873
      %875 = vmatmul.f32.gmra.mxu0 %v812
      %v876 = vpop.f32.mrf.mxu0
      %v877 = vadd.f32 0.0, %v876
      %878 = vmatmul.f32.gmra.mxu0 %v815
      %v879 = vpop.f32.mrf.mxu0
      %v880 = vadd.f32 0.0, %v879
      %881 = vmatmul.f32.gmra.mxu0 %v818
      %v882 = vpop.f32.mrf.mxu0
      %v883 = vadd.f32 0.0, %v882
      %884 = vmatmul.f32.gmra.mxu0 %v821
      %v885 = vpop.f32.mrf.mxu0
      %v886 = vadd.f32 0.0, %v885
      %887 = vmatmul.f32.gmra.mxu0 %v824
      %v888 = vpop.f32.mrf.mxu0
      %v889 = vadd.f32 0.0, %v888
      %890 = vmatmul.f32.gmra.mxu0 %v827
      %v891 = vpop.f32.mrf.mxu0
      %v892 = vadd.f32 0.0, %v891
      %893 = vmatmul.f32.gmra.mxu0 %v830
      %v894 = vpop.f32.mrf.mxu0
      %v895 = vadd.f32 0.0, %v894
      %896 = vmatmul.f32.gmra.mxu0 %v833
      %v897 = vpop.f32.mrf.mxu0
      %v898 = vadd.f32 0.0, %v897
      %899 = vmatmul.f32.gmra.mxu0 %v836
      %v900 = vpop.f32.mrf.mxu0
      %v901 = vadd.f32 0.0, %v900
      %902 = vmatmul.f32.gmra.mxu0 %v839
      %v903 = vpop.f32.mrf.mxu0
      %v904 = vadd.f32 0.0, %v903
      %905 = vdwg.mxu0
      %906 = vmatpush.msra.mxu0 0.0
      %907 = vmatpush.msra.mxu0 0.0
      %908 = vmatpush.msra.mxu0 0.0
      %909 = vmatpush.msra.mxu0 0.0
      %910 = vmatpush.msra.mxu0 0.0
      %911 = vmatpush.msra.mxu0 0.0
      %912 = vmatpush.msra.mxu0 0.0
      %913 = vmatpush.msra.mxu0 0.0
      %914 = vmatpush.msra.mxu0 0.0
      %915 = vmatpush.msra.mxu0 0.0
      %916 = vmatpush.msra.mxu0 0.0
      %917 = vmatpush.msra.mxu0 0.0
      %918 = vmatpush.msra.mxu0 %v791
      %919 = vmatpush.msra.mxu0 %v789
      %920 = vmatpush.msra.mxu0 %v787
      %921 = vmatpush.msra.mxu0 %v785
      %922 = vmatmul.f32.gmra.mxu0 %v794
      %v923 = vpop.f32.mrf.mxu0
      %v924 = vadd.f32 0.0, %v923
      %925 = vmatmul.f32.gmra.mxu0 %v797
      %v926 = vpop.f32.mrf.mxu0
      %v927 = vadd.f32 0.0, %v926
      %928 = vmatmul.f32.gmra.mxu0 %v800
      %v929 = vpop.f32.mrf.mxu0
      %v930 = vadd.f32 0.0, %v929
      %931 = vmatmul.f32.gmra.mxu0 %v803
      %v932 = vpop.f32.mrf.mxu0
      %v933 = vadd.f32 0.0, %v932
      %934 = vmatmul.f32.gmra.mxu0 %v806
      %v935 = vpop.f32.mrf.mxu0
      %v936 = vadd.f32 0.0, %v935
      %937 = vmatmul.f32.gmra.mxu0 %v809
      %v938 = vpop.f32.mrf.mxu0
      %v939 = vadd.f32 0.0, %v938
      %940 = vmatmul.f32.gmra.mxu0 %v812
      %v941 = vpop.f32.mrf.mxu0
      %v942 = vadd.f32 0.0, %v941
      %943 = vmatmul.f32.gmra.mxu0 %v815
      %v944 = vpop.f32.mrf.mxu0
      %v945 = vadd.f32 0.0, %v944
      %946 = vmatmul.f32.gmra.mxu0 %v818
      %v947 = vpop.f32.mrf.mxu0
      %v948 = vadd.f32 0.0, %v947
      %949 = vmatmul.f32.gmra.mxu0 %v821
      %v950 = vpop.f32.mrf.mxu0
      %v951 = vadd.f32 0.0, %v950
      %952 = vmatmul.f32.gmra.mxu0 %v824
      %v953 = vpop.f32.mrf.mxu0
      %v954 = vadd.f32 0.0, %v953
      %955 = vmatmul.f32.gmra.mxu0 %v827
      %v956 = vpop.f32.mrf.mxu0
      %v957 = vadd.f32 0.0, %v956
      %958 = vmatmul.f32.gmra.mxu0 %v830
      %v959 = vpop.f32.mrf.mxu0
      %v960 = vadd.f32 0.0, %v959
      %961 = vmatmul.f32.gmra.mxu0 %v833
      %v962 = vpop.f32.mrf.mxu0
      %v963 = vadd.f32 0.0, %v962
      %964 = vmatmul.f32.gmra.mxu0 %v836
      %v965 = vpop.f32.mrf.mxu0
      %v966 = vadd.f32 0.0, %v965
      %967 = vmatmul.f32.gmra.mxu0 %v839
      %v968 = vpop.f32.mrf.mxu0
      %v969 = vadd.f32 0.0, %v968
      %970 = vdwg.mxu0
      %s971 = scalar_lea.vmem %s290, %s572
      %v972 = vld [vmem:[%s971] sm:$0xff]
      %v973 = vld [vmem:[%s971 + $0x8] sm:$0xff]
      %v974 = vld [vmem:[%s971 + $0x10] sm:$0xff]
      %v975 = vld [vmem:[%s971 + $0x18] sm:$0xff]
      %v976 = vld [vmem:[%s971 + $0x20] sm:$0xff]
      %v977 = vld [vmem:[%s971 + $0x28] sm:$0xff]
      %v978 = vld [vmem:[%s971 + $0x30] sm:$0xff]
      %v979 = vld [vmem:[%s971 + $0x38] sm:$0xff]
      %v980 = vld [vmem:[%s971 + $0x40] sm:$0xff]
      %v981 = vld [vmem:[%s971 + $0x48] sm:$0xff]
      %v982 = vld [vmem:[%s971 + $0x50] sm:$0xff]
      %v983 = vld [vmem:[%s971 + $0x58] sm:$0xff]
      %v984 = vld [vmem:[%s971 + $0x60] sm:$0xff]
      %v985 = vld [vmem:[%s971 + $0x68] sm:$0xff]
      %v986 = vld [vmem:[%s971 + $0x70] sm:$0xff]
      %v987 = vld [vmem:[%s971 + $0x78] sm:$0xff]
      %989 = vset.pattern.permute.xlu0 0
      %990 = vperm.xlu0 %989, %v972
      %v991 = vpop.permute.xlu0 %990
      %994 = vset.pattern.permute.xlu0 0
      %995 = vperm.xlu0 %994, %v973
      %v996 = vpop.permute.xlu0 %995
      %999 = vset.pattern.permute.xlu0 0
      %1000 = vperm.xlu0 %999, %v974
      %v1001 = vpop.permute.xlu0 %1000
      %1004 = vset.pattern.permute.xlu0 0
      %1005 = vperm.xlu0 %1004, %v975
      %v1006 = vpop.permute.xlu0 %1005
      %1009 = vset.pattern.permute.xlu0 0
      %1010 = vperm.xlu0 %1009, %v976
      %v1011 = vpop.permute.xlu0 %1010
      %1014 = vset.pattern.permute.xlu0 0
      %1015 = vperm.xlu0 %1014, %v977
      %v1016 = vpop.permute.xlu0 %1015
      %1019 = vset.pattern.permute.xlu0 0
      %1020 = vperm.xlu0 %1019, %v978
      %v1021 = vpop.permute.xlu0 %1020
      %1024 = vset.pattern.permute.xlu0 0
      %1025 = vperm.xlu0 %1024, %v979
      %v1026 = vpop.permute.xlu0 %1025
      %1029 = vset.pattern.permute.xlu0 0
      %1030 = vperm.xlu0 %1029, %v980
      %v1031 = vpop.permute.xlu0 %1030
      %1034 = vset.pattern.permute.xlu0 0
      %1035 = vperm.xlu0 %1034, %v981
      %v1036 = vpop.permute.xlu0 %1035
      %1039 = vset.pattern.permute.xlu0 0
      %1040 = vperm.xlu0 %1039, %v982
      %v1041 = vpop.permute.xlu0 %1040
      %1044 = vset.pattern.permute.xlu0 0
      %1045 = vperm.xlu0 %1044, %v983
      %v1046 = vpop.permute.xlu0 %1045
      %1049 = vset.pattern.permute.xlu0 0
      %1050 = vperm.xlu0 %1049, %v984
      %v1051 = vpop.permute.xlu0 %1050
      %1054 = vset.pattern.permute.xlu0 0
      %1055 = vperm.xlu0 %1054, %v985
      %v1056 = vpop.permute.xlu0 %1055
      %1059 = vset.pattern.permute.xlu0 0
      %1060 = vperm.xlu0 %1059, %v986
      %v1061 = vpop.permute.xlu0 %1060
      %1064 = vset.pattern.permute.xlu0 0
      %1065 = vperm.xlu0 %1064, %v987
      %v1066 = vpop.permute.xlu0 %1065
      %v1068 = vmul.f32 %v991, %v859
      %v1069 = vmul.f32 %v996, %v862
      %v1070 = vmul.f32 %v1001, %v865
      %v1071 = vmul.f32 %v1006, %v868
      %v1072 = vmul.f32 %v1011, %v871
      %v1073 = vmul.f32 %v1016, %v874
      %v1074 = vmul.f32 %v1021, %v877
      %v1075 = vmul.f32 %v1026, %v880
      %v1076 = vmul.f32 %v1031, %v883
      %v1077 = vmul.f32 %v1036, %v886
      %v1078 = vmul.f32 %v1041, %v889
      %v1079 = vmul.f32 %v1046, %v892
      %v1080 = vmul.f32 %v1051, %v895
      %v1081 = vmul.f32 %v1056, %v898
      %v1082 = vmul.f32 %v1061, %v901
      %v1083 = vmul.f32 %v1066, %v904
      %v1084 = vmul.f32 %v1068, %v720
      %v1085 = vmul.f32 %v1069, %v723
      %v1086 = vmul.f32 %v1070, %v726
      %v1087 = vmul.f32 %v1071, %v729
      %v1088 = vmul.f32 %v1072, %v732
      %v1089 = vmul.f32 %v1073, %v735
      %v1090 = vmul.f32 %v1074, %v738
      %v1091 = vmul.f32 %v1075, %v741
      %v1092 = vmul.f32 %v1076, %v744
      %v1093 = vmul.f32 %v1077, %v747
      %v1094 = vmul.f32 %v1078, %v750
      %v1095 = vmul.f32 %v1079, %v753
      %v1096 = vmul.f32 %v1080, %v756
      %v1097 = vmul.f32 %v1081, %v759
      %v1098 = vmul.f32 %v1082, %v762
      %v1099 = vmul.f32 %v1083, %v765
      %1100 = vadd.xlane.f32.xlu0 %v1084
      %v1101 = vpop.xlane.xlu0 %1100
      %1102 = vadd.xlane.f32.xlu0 %v1085
      %v1103 = vpop.xlane.xlu0 %1102
      %1104 = vadd.xlane.f32.xlu0 %v1086
      %v1105 = vpop.xlane.xlu0 %1104
      %1106 = vadd.xlane.f32.xlu0 %v1087
      %v1107 = vpop.xlane.xlu0 %1106
      %1108 = vadd.xlane.f32.xlu0 %v1088
      %v1109 = vpop.xlane.xlu0 %1108
      %1110 = vadd.xlane.f32.xlu0 %v1089
      %v1111 = vpop.xlane.xlu0 %1110
      %1112 = vadd.xlane.f32.xlu0 %v1090
      %v1113 = vpop.xlane.xlu0 %1112
      %1114 = vadd.xlane.f32.xlu0 %v1091
      %v1115 = vpop.xlane.xlu0 %1114
      %1116 = vadd.xlane.f32.xlu0 %v1092
      %v1117 = vpop.xlane.xlu0 %1116
      %1118 = vadd.xlane.f32.xlu0 %v1093
      %v1119 = vpop.xlane.xlu0 %1118
      %1120 = vadd.xlane.f32.xlu0 %v1094
      %v1121 = vpop.xlane.xlu0 %1120
      %1122 = vadd.xlane.f32.xlu0 %v1095
      %v1123 = vpop.xlane.xlu0 %1122
      %1124 = vadd.xlane.f32.xlu0 %v1096
      %v1125 = vpop.xlane.xlu0 %1124
      %1126 = vadd.xlane.f32.xlu0 %v1097
      %v1127 = vpop.xlane.xlu0 %1126
      %1128 = vadd.xlane.f32.xlu0 %v1098
      %v1129 = vpop.xlane.xlu0 %1128
      %1130 = vadd.xlane.f32.xlu0 %v1099
      %v1131 = vpop.xlane.xlu0 %1130
      %v1132 = vmul.f32 %v1101, 0.125
      %v1133 = vmul.f32 %v1103, 0.125
      %v1134 = vmul.f32 %v1105, 0.125
      %v1135 = vmul.f32 %v1107, 0.125
      %v1136 = vmul.f32 %v1109, 0.125
      %v1137 = vmul.f32 %v1111, 0.125
      %v1138 = vmul.f32 %v1113, 0.125
      %v1139 = vmul.f32 %v1115, 0.125
      %v1140 = vmul.f32 %v1117, 0.125
      %v1141 = vmul.f32 %v1119, 0.125
      %v1142 = vmul.f32 %v1121, 0.125
      %v1143 = vmul.f32 %v1123, 0.125
      %v1144 = vmul.f32 %v1125, 0.125
      %v1145 = vmul.f32 %v1127, 0.125
      %v1146 = vmul.f32 %v1129, 0.125
      %v1147 = vmul.f32 %v1131, 0.125
      %s1148 = scalar_lea.vmem [#allocation3], %s572
      %vm1149 = vcmask 7168
      %1150 = vst.msk [vmem:[%s1148] sm:$0xff] %vm1149, %v1132
      %1151 = vst.msk [vmem:[%s1148 + $0x8] sm:$0xff] %vm1149, %v1133
      %1152 = vst.msk [vmem:[%s1148 + $0x10] sm:$0xff] %vm1149, %v1134
      %1153 = vst.msk [vmem:[%s1148 + $0x18] sm:$0xff] %vm1149, %v1135
      %1154 = vst.msk [vmem:[%s1148 + $0x20] sm:$0xff] %vm1149, %v1136
      %1155 = vst.msk [vmem:[%s1148 + $0x28] sm:$0xff] %vm1149, %v1137
      %1156 = vst.msk [vmem:[%s1148 + $0x30] sm:$0xff] %vm1149, %v1138
      %1157 = vst.msk [vmem:[%s1148 + $0x38] sm:$0xff] %vm1149, %v1139
      %1158 = vst.msk [vmem:[%s1148 + $0x40] sm:$0xff] %vm1149, %v1140
      %1159 = vst.msk [vmem:[%s1148 + $0x48] sm:$0xff] %vm1149, %v1141
      %1160 = vst.msk [vmem:[%s1148 + $0x50] sm:$0xff] %vm1149, %v1142
      %1161 = vst.msk [vmem:[%s1148 + $0x58] sm:$0xff] %vm1149, %v1143
      %1162 = vst.msk [vmem:[%s1148 + $0x60] sm:$0xff] %vm1149, %v1144
      %1163 = vst.msk [vmem:[%s1148 + $0x68] sm:$0xff] %vm1149, %v1145
      %1164 = vst.msk [vmem:[%s1148 + $0x70] sm:$0xff] %vm1149, %v1146
      %1165 = vst.msk [vmem:[%s1148 + $0x78] sm:$0xff] %vm1149, %v1147
      %s1166 = scalar_lea.vmem %s295, %s572
      %1167 = vst.msk [vmem:[%s1166] sm:$0xff] %vm792, %v924
      %1168 = vst.msk [vmem:[%s1166 + $0x8] sm:$0xff] %vm792, %v927
      %1169 = vst.msk [vmem:[%s1166 + $0x10] sm:$0xff] %vm792, %v930
      %1170 = vst.msk [vmem:[%s1166 + $0x18] sm:$0xff] %vm792, %v933
      %1171 = vst.msk [vmem:[%s1166 + $0x20] sm:$0xff] %vm792, %v936
      %1172 = vst.msk [vmem:[%s1166 + $0x28] sm:$0xff] %vm792, %v939
      %1173 = vst.msk [vmem:[%s1166 + $0x30] sm:$0xff] %vm792, %v942
      %1174 = vst.msk [vmem:[%s1166 + $0x38] sm:$0xff] %vm792, %v945
      %1175 = vst.msk [vmem:[%s1166 + $0x40] sm:$0xff] %vm792, %v948
      %1176 = vst.msk [vmem:[%s1166 + $0x48] sm:$0xff] %vm792, %v951
      %1177 = vst.msk [vmem:[%s1166 + $0x50] sm:$0xff] %vm792, %v954
      %1178 = vst.msk [vmem:[%s1166 + $0x58] sm:$0xff] %vm792, %v957
      %1179 = vst.msk [vmem:[%s1166 + $0x60] sm:$0xff] %vm792, %v960
      %1180 = vst.msk [vmem:[%s1166 + $0x68] sm:$0xff] %vm792, %v963
      %1181 = vst.msk [vmem:[%s1166 + $0x70] sm:$0xff] %vm792, %v966
      %1182 = vst.msk [vmem:[%s1166 + $0x78] sm:$0xff] %vm792, %v969
      %p1183 = scmp.eq.s32.totalorder %s21, 1
      // Predicated region
      $region52: #{tpu_custom_call.1} parent=39 // pred_check
        %p1184 = pneg %p1183
      $region53: #{tpu_custom_call.1} parent=39 // pred_check_branch
        %1186 = sbr.rel (%p1184) target = $region55
      $region54: #{tpu_custom_call.1} parent=39 // pred_region
        %v1187 = vld [vmem:[#allocation3] sm:$0xff]
        %v1188 = vld [vmem:[#allocation3 + $0x8] sm:$0xff]
        %v1189 = vld [vmem:[#allocation3 + $0x10] sm:$0xff]
        %v1190 = vld [vmem:[#allocation3 + $0x18] sm:$0xff]
        %v1191 = vld [vmem:[#allocation3 + $0x20] sm:$0xff]
        %v1192 = vld [vmem:[#allocation3 + $0x28] sm:$0xff]
        %v1193 = vld [vmem:[#allocation3 + $0x30] sm:$0xff]
        %v1194 = vld [vmem:[#allocation3 + $0x38] sm:$0xff]
        %v1195 = vld [vmem:[#allocation3 + $0x40] sm:$0xff]
        %v1196 = vld [vmem:[#allocation3 + $0x48] sm:$0xff]
        %v1197 = vld [vmem:[#allocation3 + $0x50] sm:$0xff]
        %v1198 = vld [vmem:[#allocation3 + $0x58] sm:$0xff]
        %v1199 = vld [vmem:[#allocation3 + $0x60] sm:$0xff]
        %v1200 = vld [vmem:[#allocation3 + $0x68] sm:$0xff]
        %v1201 = vld [vmem:[#allocation3 + $0x70] sm:$0xff]
        %v1202 = vld [vmem:[#allocation3 + $0x78] sm:$0xff]
        %v1203 = vld [vmem:[#allocation3 + $0x80] sm:$0xff]
        %v1204 = vld [vmem:[#allocation3 + $0x88] sm:$0xff]
        %v1205 = vld [vmem:[#allocation3 + $0x90] sm:$0xff]
        %v1206 = vld [vmem:[#allocation3 + $0x98] sm:$0xff]
        %v1207 = vld [vmem:[#allocation3 + $0xa0] sm:$0xff]
        %v1208 = vld [vmem:[#allocation3 + $0xa8] sm:$0xff]
        %v1209 = vld [vmem:[#allocation3 + $0xb0] sm:$0xff]
        %v1210 = vld [vmem:[#allocation3 + $0xb8] sm:$0xff]
        %v1211 = vld [vmem:[#allocation3 + $0xc0] sm:$0xff]
        %v1212 = vld [vmem:[#allocation3 + $0xc8] sm:$0xff]
        %v1213 = vld [vmem:[#allocation3 + $0xd0] sm:$0xff]
        %v1214 = vld [vmem:[#allocation3 + $0xd8] sm:$0xff]
        %v1215 = vld [vmem:[#allocation3 + $0xe0] sm:$0xff]
        %v1216 = vld [vmem:[#allocation3 + $0xe8] sm:$0xff]
        %v1217 = vld [vmem:[#allocation3 + $0xf0] sm:$0xff]
        %v1218 = vld [vmem:[#allocation3 + $0xf8] sm:$0xff]
        %v1219 = vsel %vm1149, %v1187, -inf
        %v1220 = vsel %vm1149, %v1188, -inf
        %v1221 = vsel %vm1149, %v1189, -inf
        %v1222 = vsel %vm1149, %v1190, -inf
        %v1223 = vsel %vm1149, %v1191, -inf
        %v1224 = vmax.f32 %v1219, %v1223
        %v1225 = vsel %vm1149, %v1192, -inf
        %v1226 = vmax.f32 %v1220, %v1225
        %v1227 = vsel %vm1149, %v1193, -inf
        %v1228 = vmax.f32 %v1221, %v1227
        %v1229 = vsel %vm1149, %v1194, -inf
        %v1230 = vmax.f32 %v1222, %v1229
        %v1231 = vsel %vm1149, %v1195, -inf
        %v1232 = vmax.f32 %v1224, %v1231
        %v1233 = vsel %vm1149, %v1196, -inf
        %v1234 = vmax.f32 %v1226, %v1233
        %v1235 = vsel %vm1149, %v1197, -inf
        %v1236 = vmax.f32 %v1228, %v1235
        %v1237 = vsel %vm1149, %v1198, -inf
        %v1238 = vmax.f32 %v1230, %v1237
        %v1239 = vsel %vm1149, %v1199, -inf
        %v1240 = vmax.f32 %v1232, %v1239
        %v1241 = vsel %vm1149, %v1200, -inf
        %v1242 = vmax.f32 %v1234, %v1241
        %v1243 = vsel %vm1149, %v1201, -inf
        %v1244 = vmax.f32 %v1236, %v1243
        %v1245 = vsel %vm1149, %v1202, -inf
        %v1246 = vmax.f32 %v1238, %v1245
        %v1247 = vsel %vm1149, %v1203, -inf
        %v1248 = vmax.f32 %v1240, %v1247
        %v1249 = vsel %vm1149, %v1204, -inf
        %v1250 = vmax.f32 %v1242, %v1249
        %v1251 = vsel %vm1149, %v1205, -inf
        %v1252 = vmax.f32 %v1244, %v1251
        %v1253 = vsel %vm1149, %v1206, -inf
        %v1254 = vmax.f32 %v1246, %v1253
        %v1255 = vsel %vm1149, %v1207, -inf
        %v1256 = vmax.f32 %v1248, %v1255
        %v1257 = vsel %vm1149, %v1208, -inf
        %v1258 = vmax.f32 %v1250, %v1257
        %v1259 = vsel %vm1149, %v1209, -inf
        %v1260 = vmax.f32 %v1252, %v1259
        %v1261 = vsel %vm1149, %v1210, -inf
        %v1262 = vmax.f32 %v1254, %v1261
        %v1263 = vsel %vm1149, %v1211, -inf
        %v1264 = vmax.f32 %v1256, %v1263
        %v1265 = vsel %vm1149, %v1212, -inf
        %v1266 = vmax.f32 %v1258, %v1265
        %v1267 = vsel %vm1149, %v1213, -inf
        %v1268 = vmax.f32 %v1260, %v1267
        %v1269 = vsel %vm1149, %v1214, -inf
        %v1270 = vmax.f32 %v1262, %v1269
        %v1271 = vsel %vm1149, %v1215, -inf
        %v1272 = vmax.f32 %v1264, %v1271
        %v1273 = vsel %vm1149, %v1216, -inf
        %v1274 = vmax.f32 %v1266, %v1273
        %v1275 = vsel %vm1149, %v1217, -inf
        %v1276 = vmax.f32 %v1268, %v1275
        %v1277 = vsel %vm1149, %v1218, -inf
        %v1278 = vmax.f32 %v1270, %v1277
        %v1279 = vmax.f32 %v1272, %v1274
        %v1280 = vmax.f32 %v1276, %v1278
        %v1281 = vmax.f32 %v1279, %v1280
        %v1282 = vrot.slane %v1281, 4
        %v1283 = vmax.f32 %v1281, %v1282
        %v1284 = vrot.slane %v1283, 2
        %v1285 = vmax.f32 %v1283, %v1284
        %v1286 = vrot.slane %v1285, 1
        %v1287 = vmax.f32 %v1285, %v1286
        %v1288 = vsub.f32 %v1187, %v1287
        %v1289 = vsub.f32 %v1188, %v1287
        %v1290 = vsub.f32 %v1189, %v1287
        %v1291 = vsub.f32 %v1190, %v1287
        %v1292 = vsub.f32 %v1191, %v1287
        %v1293 = vsub.f32 %v1192, %v1287
        %v1294 = vsub.f32 %v1193, %v1287
        %v1295 = vsub.f32 %v1194, %v1287
        %v1296 = vsub.f32 %v1195, %v1287
        %v1297 = vsub.f32 %v1196, %v1287
        %v1298 = vsub.f32 %v1197, %v1287
        %v1299 = vsub.f32 %v1198, %v1287
        %v1300 = vsub.f32 %v1199, %v1287
        %v1301 = vsub.f32 %v1200, %v1287
        %v1302 = vsub.f32 %v1201, %v1287
        %v1303 = vsub.f32 %v1202, %v1287
        %v1304 = vsub.f32 %v1203, %v1287
        %v1305 = vsub.f32 %v1204, %v1287
        %v1306 = vsub.f32 %v1205, %v1287
        %v1307 = vsub.f32 %v1206, %v1287
        %v1308 = vsub.f32 %v1207, %v1287
        %v1309 = vsub.f32 %v1208, %v1287
        %v1310 = vsub.f32 %v1209, %v1287
        %v1311 = vsub.f32 %v1210, %v1287
        %v1312 = vsub.f32 %v1211, %v1287
        %v1313 = vsub.f32 %v1212, %v1287
        %v1314 = vsub.f32 %v1213, %v1287
        %v1315 = vsub.f32 %v1214, %v1287
        %v1316 = vsub.f32 %v1215, %v1287
        %v1317 = vsub.f32 %v1216, %v1287
        %v1318 = vsub.f32 %v1217, %v1287
        %v1319 = vsub.f32 %v1218, %v1287
        %v1320 = vmul.f32 %v1288, 1.442695
        %v1321 = vpow.pop %v1320
        %v1322 = vmul.f32 %v1289, 1.442695
        %v1323 = vpow.pop %v1322
        %v1324 = vmul.f32 %v1290, 1.442695
        %v1325 = vpow.pop %v1324
        %v1326 = vmul.f32 %v1291, 1.442695
        %v1327 = vpow.pop %v1326
        %v1328 = vmul.f32 %v1292, 1.442695
        %v1329 = vpow.pop %v1328
        %v1330 = vmul.f32 %v1293, 1.442695
        %v1331 = vpow.pop %v1330
        %v1332 = vmul.f32 %v1294, 1.442695
        %v1333 = vpow.pop %v1332
        %v1334 = vmul.f32 %v1295, 1.442695
        %v1335 = vpow.pop %v1334
        %v1336 = vmul.f32 %v1296, 1.442695
        %v1337 = vpow.pop %v1336
        %v1338 = vmul.f32 %v1297, 1.442695
        %v1339 = vpow.pop %v1338
        %v1340 = vmul.f32 %v1298, 1.442695
        %v1341 = vpow.pop %v1340
        %v1342 = vmul.f32 %v1299, 1.442695
        %v1343 = vpow.pop %v1342
        %v1344 = vmul.f32 %v1300, 1.442695
        %v1345 = vpow.pop %v1344
        %v1346 = vmul.f32 %v1301, 1.442695
        %v1347 = vpow.pop %v1346
        %v1348 = vmul.f32 %v1302, 1.442695
        %v1349 = vpow.pop %v1348
        %v1350 = vmul.f32 %v1303, 1.442695
        %v1351 = vpow.pop %v1350
        %v1352 = vmul.f32 %v1304, 1.442695
        %v1353 = vpow.pop %v1352
        %v1354 = vmul.f32 %v1305, 1.442695
        %v1355 = vpow.pop %v1354
        %v1356 = vmul.f32 %v1306, 1.442695
        %v1357 = vpow.pop %v1356
        %v1358 = vmul.f32 %v1307, 1.442695
        %v1359 = vpow.pop %v1358
        %v1360 = vmul.f32 %v1308, 1.442695
        %v1361 = vpow.pop %v1360
        %v1362 = vmul.f32 %v1309, 1.442695
        %v1363 = vpow.pop %v1362
        %v1364 = vmul.f32 %v1310, 1.442695
        %v1365 = vpow.pop %v1364
        %v1366 = vmul.f32 %v1311, 1.442695
        %v1367 = vpow.pop %v1366
        %v1368 = vmul.f32 %v1312, 1.442695
        %v1369 = vpow.pop %v1368
        %v1370 = vmul.f32 %v1313, 1.442695
        %v1371 = vpow.pop %v1370
        %v1372 = vmul.f32 %v1314, 1.442695
        %v1373 = vpow.pop %v1372
        %v1374 = vmul.f32 %v1315, 1.442695
        %v1375 = vpow.pop %v1374
        %v1376 = vmul.f32 %v1316, 1.442695
        %v1377 = vpow.pop %v1376
        %v1378 = vmul.f32 %v1317, 1.442695
        %v1379 = vpow.pop %v1378
        %v1380 = vmul.f32 %v1318, 1.442695
        %v1381 = vpow.pop %v1380
        %v1382 = vmul.f32 %v1319, 1.442695
        %v1383 = vpow.pop %v1382
        %v1384 = vsel %vm1149, %v1321, 0.0
        %v1385 = vsel %vm1149, %v1323, 0.0
        %v1386 = vadd.f32 %v1384, %v1385
        %v1387 = vsel %vm1149, %v1325, 0.0
        %v1388 = vadd.f32 %v1386, %v1387
        %v1389 = vsel %vm1149, %v1327, 0.0
        %v1390 = vadd.f32 %v1388, %v1389
        %v1391 = vsel %vm1149, %v1329, 0.0
        %v1392 = vadd.f32 %v1390, %v1391
        %v1393 = vsel %vm1149, %v1331, 0.0
        %v1394 = vadd.f32 %v1392, %v1393
        %v1395 = vsel %vm1149, %v1333, 0.0
        %v1396 = vadd.f32 %v1394, %v1395
        %v1397 = vsel %vm1149, %v1335, 0.0
        %v1398 = vadd.f32 %v1396, %v1397
        %v1399 = vsel %vm1149, %v1337, 0.0
        %v1400 = vadd.f32 %v1398, %v1399
        %v1401 = vsel %vm1149, %v1339, 0.0
        %v1402 = vadd.f32 %v1400, %v1401
        %v1403 = vsel %vm1149, %v1341, 0.0
        %v1404 = vadd.f32 %v1402, %v1403
        %v1405 = vsel %vm1149, %v1343, 0.0
        %v1406 = vadd.f32 %v1404, %v1405
        %v1407 = vsel %vm1149, %v1345, 0.0
        %v1408 = vadd.f32 %v1406, %v1407
        %v1409 = vsel %vm1149, %v1347, 0.0
        %v1410 = vadd.f32 %v1408, %v1409
        %v1411 = vsel %vm1149, %v1349, 0.0
        %v1412 = vadd.f32 %v1410, %v1411
        %v1413 = vsel %vm1149, %v1351, 0.0
        %v1414 = vadd.f32 %v1412, %v1413
        %v1415 = vsel %vm1149, %v1353, 0.0
        %v1416 = vadd.f32 %v1414, %v1415
        %v1417 = vsel %vm1149, %v1355, 0.0
        %v1418 = vadd.f32 %v1416, %v1417
        %v1419 = vsel %vm1149, %v1357, 0.0
        %v1420 = vadd.f32 %v1418, %v1419
        %v1421 = vsel %vm1149, %v1359, 0.0
        %v1422 = vadd.f32 %v1420, %v1421
        %v1423 = vsel %vm1149, %v1361, 0.0
        %v1424 = vadd.f32 %v1422, %v1423
        %v1425 = vsel %vm1149, %v1363, 0.0
        %v1426 = vadd.f32 %v1424, %v1425
        %v1427 = vsel %vm1149, %v1365, 0.0
        %v1428 = vadd.f32 %v1426, %v1427
        %v1429 = vsel %vm1149, %v1367, 0.0
        %v1430 = vadd.f32 %v1428, %v1429
        %v1431 = vsel %vm1149, %v1369, 0.0
        %v1432 = vadd.f32 %v1430, %v1431
        %v1433 = vsel %vm1149, %v1371, 0.0
        %v1434 = vadd.f32 %v1432, %v1433
        %v1435 = vsel %vm1149, %v1373, 0.0
        %v1436 = vadd.f32 %v1434, %v1435
        %v1437 = vsel %vm1149, %v1375, 0.0
        %v1438 = vadd.f32 %v1436, %v1437
        %v1439 = vsel %vm1149, %v1377, 0.0
        %v1440 = vadd.f32 %v1438, %v1439
        %v1441 = vsel %vm1149, %v1379, 0.0
        %v1442 = vadd.f32 %v1440, %v1441
        %v1443 = vsel %vm1149, %v1381, 0.0
        %v1444 = vadd.f32 %v1442, %v1443
        %v1445 = vsel %vm1149, %v1383, 0.0
        %v1446 = vadd.f32 %v1444, %v1445
        %v1447 = vrot.slane %v1446, 4
        %v1448 = vadd.f32 %v1446, %v1447
        %v1449 = vrot.slane %v1448, 2
        %v1450 = vadd.f32 %v1448, %v1449
        %v1451 = vrot.slane %v1450, 1
        %v1452 = vadd.f32 %v1450, %v1451
        %v1453 = vrcp.pop %v1452
        %v1454 = vmul.f32 %v1452, %v1453
        %v1455 = vsub.f32 1.0, %v1454
        %v1456 = vmul.f32 %v1453, %v1455
        %v1457 = vadd.f32 %v1453, %v1456
        %vm1458 = vweird.f32 %v1452
        %vm1459 = vweird.f32 %v1453
        %vm1460 = vmor %vm1458, %vm1459
        %v1461 = vsel %vm1460, %v1453, %v1457
        %v1462 = vand.u32 2147483647, %v1452
        %vm1463 = vcmp.eq.f32.partialorder %v1462, 8.507059e+37
        %v1464 = vand.u32 %v1452, 2147483648
        %v1465 = vor.u32 1.1754944e-38, %v1464
        %v1466 = vsel %vm1463, %v1465, %v1461
        %v1467 = vmul.f32 %v1321, %v1466
        %v1468 = vmul.f32 %v1323, %v1466
        %v1469 = vmul.f32 %v1325, %v1466
        %v1470 = vmul.f32 %v1327, %v1466
        %v1471 = vmul.f32 %v1329, %v1466
        %v1472 = vmul.f32 %v1331, %v1466
        %v1473 = vmul.f32 %v1333, %v1466
        %v1474 = vmul.f32 %v1335, %v1466
        %v1475 = vmul.f32 %v1337, %v1466
        %v1476 = vmul.f32 %v1339, %v1466
        %v1477 = vmul.f32 %v1341, %v1466
        %v1478 = vmul.f32 %v1343, %v1466
        %v1479 = vmul.f32 %v1345, %v1466
        %v1480 = vmul.f32 %v1347, %v1466
        %v1481 = vmul.f32 %v1349, %v1466
        %v1482 = vmul.f32 %v1351, %v1466
        %v1483 = vmul.f32 %v1353, %v1466
        %v1484 = vmul.f32 %v1355, %v1466
        %v1485 = vmul.f32 %v1357, %v1466
        %v1486 = vmul.f32 %v1359, %v1466
        %v1487 = vmul.f32 %v1361, %v1466
        %v1488 = vmul.f32 %v1363, %v1466
        %v1489 = vmul.f32 %v1365, %v1466
        %v1490 = vmul.f32 %v1367, %v1466
        %v1491 = vmul.f32 %v1369, %v1466
        %v1492 = vmul.f32 %v1371, %v1466
        %v1493 = vmul.f32 %v1373, %v1466
        %v1494 = vmul.f32 %v1375, %v1466
        %v1495 = vmul.f32 %v1377, %v1466
        %v1496 = vmul.f32 %v1379, %v1466
        %v1497 = vmul.f32 %v1381, %v1466
        %v1498 = vmul.f32 %v1383, %v1466
        %v1499 = vld [vmem:[%s295] sm:$0xff]
        %v1500 = vld [vmem:[%s295 + $0x8] sm:$0xff]
        %v1501 = vld [vmem:[%s295 + $0x10] sm:$0xff]
        %v1502 = vld [vmem:[%s295 + $0x18] sm:$0xff]
        %v1503 = vld [vmem:[%s295 + $0x20] sm:$0xff]
        %v1504 = vld [vmem:[%s295 + $0x28] sm:$0xff]
        %v1505 = vld [vmem:[%s295 + $0x30] sm:$0xff]
        %v1506 = vld [vmem:[%s295 + $0x38] sm:$0xff]
        %v1507 = vld [vmem:[%s295 + $0x40] sm:$0xff]
        %v1508 = vld [vmem:[%s295 + $0x48] sm:$0xff]
        %v1509 = vld [vmem:[%s295 + $0x50] sm:$0xff]
        %v1510 = vld [vmem:[%s295 + $0x58] sm:$0xff]
        %v1511 = vld [vmem:[%s295 + $0x60] sm:$0xff]
        %v1512 = vld [vmem:[%s295 + $0x68] sm:$0xff]
        %v1513 = vld [vmem:[%s295 + $0x70] sm:$0xff]
        %v1514 = vld [vmem:[%s295 + $0x78] sm:$0xff]
        %v1515 = vld [vmem:[%s295 + $0x80] sm:$0xff]
        %v1516 = vld [vmem:[%s295 + $0x88] sm:$0xff]
        %v1517 = vld [vmem:[%s295 + $0x90] sm:$0xff]
        %v1518 = vld [vmem:[%s295 + $0x98] sm:$0xff]
        %v1519 = vld [vmem:[%s295 + $0xa0] sm:$0xff]
        %v1520 = vld [vmem:[%s295 + $0xa8] sm:$0xff]
        %v1521 = vld [vmem:[%s295 + $0xb0] sm:$0xff]
        %v1522 = vld [vmem:[%s295 + $0xb8] sm:$0xff]
        %v1523 = vld [vmem:[%s295 + $0xc0] sm:$0xff]
        %v1524 = vld [vmem:[%s295 + $0xc8] sm:$0xff]
        %v1525 = vld [vmem:[%s295 + $0xd0] sm:$0xff]
        %v1526 = vld [vmem:[%s295 + $0xd8] sm:$0xff]
        %v1527 = vld [vmem:[%s295 + $0xe0] sm:$0xff]
        %v1528 = vld [vmem:[%s295 + $0xe8] sm:$0xff]
        %v1529 = vld [vmem:[%s295 + $0xf0] sm:$0xff]
        %v1530 = vld [vmem:[%s295 + $0xf8] sm:$0xff]
        %1532 = vset.pattern.permute.xlu0 0
        %1533 = vperm.xlu0 %1532, %v1467
        %v1534 = vpop.permute.xlu0 %1533
        %1537 = vset.pattern.permute.xlu0 0
        %1538 = vperm.xlu0 %1537, %v1468
        %v1539 = vpop.permute.xlu0 %1538
        %1542 = vset.pattern.permute.xlu0 0
        %1543 = vperm.xlu0 %1542, %v1469
        %v1544 = vpop.permute.xlu0 %1543
        %1547 = vset.pattern.permute.xlu0 0
        %1548 = vperm.xlu0 %1547, %v1470
        %v1549 = vpop.permute.xlu0 %1548
        %1552 = vset.pattern.permute.xlu0 0
        %1553 = vperm.xlu0 %1552, %v1471
        %v1554 = vpop.permute.xlu0 %1553
        %1557 = vset.pattern.permute.xlu0 0
        %1558 = vperm.xlu0 %1557, %v1472
        %v1559 = vpop.permute.xlu0 %1558
        %1562 = vset.pattern.permute.xlu0 0
        %1563 = vperm.xlu0 %1562, %v1473
        %v1564 = vpop.permute.xlu0 %1563
        %1567 = vset.pattern.permute.xlu0 0
        %1568 = vperm.xlu0 %1567, %v1474
        %v1569 = vpop.permute.xlu0 %1568
        %1572 = vset.pattern.permute.xlu0 0
        %1573 = vperm.xlu0 %1572, %v1475
        %v1574 = vpop.permute.xlu0 %1573
        %1577 = vset.pattern.permute.xlu0 0
        %1578 = vperm.xlu0 %1577, %v1476
        %v1579 = vpop.permute.xlu0 %1578
        %1582 = vset.pattern.permute.xlu0 0
        %1583 = vperm.xlu0 %1582, %v1477
        %v1584 = vpop.permute.xlu0 %1583
        %1587 = vset.pattern.permute.xlu0 0
        %1588 = vperm.xlu0 %1587, %v1478
        %v1589 = vpop.permute.xlu0 %1588
        %1592 = vset.pattern.permute.xlu0 0
        %1593 = vperm.xlu0 %1592, %v1479
        %v1594 = vpop.permute.xlu0 %1593
        %1597 = vset.pattern.permute.xlu0 0
        %1598 = vperm.xlu0 %1597, %v1480
        %v1599 = vpop.permute.xlu0 %1598
        %1602 = vset.pattern.permute.xlu0 0
        %1603 = vperm.xlu0 %1602, %v1481
        %v1604 = vpop.permute.xlu0 %1603
        %1607 = vset.pattern.permute.xlu0 0
        %1608 = vperm.xlu0 %1607, %v1482
        %v1609 = vpop.permute.xlu0 %1608
        %1612 = vset.pattern.permute.xlu0 0
        %1613 = vperm.xlu0 %1612, %v1483
        %v1614 = vpop.permute.xlu0 %1613
        %1617 = vset.pattern.permute.xlu0 0
        %1618 = vperm.xlu0 %1617, %v1484
        %v1619 = vpop.permute.xlu0 %1618
        %1622 = vset.pattern.permute.xlu0 0
        %1623 = vperm.xlu0 %1622, %v1485
        %v1624 = vpop.permute.xlu0 %1623
        %1627 = vset.pattern.permute.xlu0 0
        %1628 = vperm.xlu0 %1627, %v1486
        %v1629 = vpop.permute.xlu0 %1628
        %1632 = vset.pattern.permute.xlu0 0
        %1633 = vperm.xlu0 %1632, %v1487
        %v1634 = vpop.permute.xlu0 %1633
        %1637 = vset.pattern.permute.xlu0 0
        %1638 = vperm.xlu0 %1637, %v1488
        %v1639 = vpop.permute.xlu0 %1638
        %1642 = vset.pattern.permute.xlu0 0
        %1643 = vperm.xlu0 %1642, %v1489
        %v1644 = vpop.permute.xlu0 %1643
        %1647 = vset.pattern.permute.xlu0 0
        %1648 = vperm.xlu0 %1647, %v1490
        %v1649 = vpop.permute.xlu0 %1648
        %1652 = vset.pattern.permute.xlu0 0
        %1653 = vperm.xlu0 %1652, %v1491
        %v1654 = vpop.permute.xlu0 %1653
        %1657 = vset.pattern.permute.xlu0 0
        %1658 = vperm.xlu0 %1657, %v1492
        %v1659 = vpop.permute.xlu0 %1658
        %1662 = vset.pattern.permute.xlu0 0
        %1663 = vperm.xlu0 %1662, %v1493
        %v1664 = vpop.permute.xlu0 %1663
        %1667 = vset.pattern.permute.xlu0 0
        %1668 = vperm.xlu0 %1667, %v1494
        %v1669 = vpop.permute.xlu0 %1668
        %1672 = vset.pattern.permute.xlu0 0
        %1673 = vperm.xlu0 %1672, %v1495
        %v1674 = vpop.permute.xlu0 %1673
        %1677 = vset.pattern.permute.xlu0 0
        %1678 = vperm.xlu0 %1677, %v1496
        %v1679 = vpop.permute.xlu0 %1678
        %1682 = vset.pattern.permute.xlu0 0
        %1683 = vperm.xlu0 %1682, %v1497
        %v1684 = vpop.permute.xlu0 %1683
        %1687 = vset.pattern.permute.xlu0 0
        %1688 = vperm.xlu0 %1687, %v1498
        %v1689 = vpop.permute.xlu0 %1688
        %v1691 = vmul.f32 %v1534, %v1499
        %v1692 = vmul.f32 %v1539, %v1500
        %v1693 = vmul.f32 %v1544, %v1501
        %v1694 = vmul.f32 %v1549, %v1502
        %v1695 = vmul.f32 %v1554, %v1503
        %v1696 = vmul.f32 %v1559, %v1504
        %v1697 = vmul.f32 %v1564, %v1505
        %v1698 = vmul.f32 %v1569, %v1506
        %v1699 = vmul.f32 %v1574, %v1507
        %v1700 = vmul.f32 %v1579, %v1508
        %v1701 = vmul.f32 %v1584, %v1509
        %v1702 = vmul.f32 %v1589, %v1510
        %v1703 = vmul.f32 %v1594, %v1511
        %v1704 = vmul.f32 %v1599, %v1512
        %v1705 = vmul.f32 %v1604, %v1513
        %v1706 = vmul.f32 %v1609, %v1514
        %v1707 = vmul.f32 %v1614, %v1515
        %v1708 = vmul.f32 %v1619, %v1516
        %v1709 = vmul.f32 %v1624, %v1517
        %v1710 = vmul.f32 %v1629, %v1518
        %v1711 = vmul.f32 %v1634, %v1519
        %v1712 = vmul.f32 %v1639, %v1520
        %v1713 = vmul.f32 %v1644, %v1521
        %v1714 = vmul.f32 %v1649, %v1522
        %v1715 = vmul.f32 %v1654, %v1523
        %v1716 = vmul.f32 %v1659, %v1524
        %v1717 = vmul.f32 %v1664, %v1525
        %v1718 = vmul.f32 %v1669, %v1526
        %v1719 = vmul.f32 %v1674, %v1527
        %v1720 = vmul.f32 %v1679, %v1528
        %v1721 = vmul.f32 %v1684, %v1529
        %v1722 = vmul.f32 %v1689, %v1530
        %1723 = vst.msk [vmem:[%s295] sm:$0xff] %vm792, %v1691
        %1724 = vst.msk [vmem:[%s295 + $0x8] sm:$0xff] %vm792, %v1692
        %1725 = vst.msk [vmem:[%s295 + $0x10] sm:$0xff] %vm792, %v1693
        %1726 = vst.msk [vmem:[%s295 + $0x18] sm:$0xff] %vm792, %v1694
        %1727 = vst.msk [vmem:[%s295 + $0x20] sm:$0xff] %vm792, %v1695
        %1728 = vst.msk [vmem:[%s295 + $0x28] sm:$0xff] %vm792, %v1696
        %1729 = vst.msk [vmem:[%s295 + $0x30] sm:$0xff] %vm792, %v1697
        %1730 = vst.msk [vmem:[%s295 + $0x38] sm:$0xff] %vm792, %v1698
        %1731 = vst.msk [vmem:[%s295 + $0x40] sm:$0xff] %vm792, %v1699
        %1732 = vst.msk [vmem:[%s295 + $0x48] sm:$0xff] %vm792, %v1700
        %1733 = vst.msk [vmem:[%s295 + $0x50] sm:$0xff] %vm792, %v1701
        %1734 = vst.msk [vmem:[%s295 + $0x58] sm:$0xff] %vm792, %v1702
        %1735 = vst.msk [vmem:[%s295 + $0x60] sm:$0xff] %vm792, %v1703
        %1736 = vst.msk [vmem:[%s295 + $0x68] sm:$0xff] %vm792, %v1704
        %1737 = vst.msk [vmem:[%s295 + $0x70] sm:$0xff] %vm792, %v1705
        %1738 = vst.msk [vmem:[%s295 + $0x78] sm:$0xff] %vm792, %v1706
        %1739 = vst.msk [vmem:[%s295 + $0x80] sm:$0xff] %vm792, %v1707
        %1740 = vst.msk [vmem:[%s295 + $0x88] sm:$0xff] %vm792, %v1708
        %1741 = vst.msk [vmem:[%s295 + $0x90] sm:$0xff] %vm792, %v1709
        %1742 = vst.msk [vmem:[%s295 + $0x98] sm:$0xff] %vm792, %v1710
        %1743 = vst.msk [vmem:[%s295 + $0xa0] sm:$0xff] %vm792, %v1711
        %1744 = vst.msk [vmem:[%s295 + $0xa8] sm:$0xff] %vm792, %v1712
        %1745 = vst.msk [vmem:[%s295 + $0xb0] sm:$0xff] %vm792, %v1713
        %1746 = vst.msk [vmem:[%s295 + $0xb8] sm:$0xff] %vm792, %v1714
        %1747 = vst.msk [vmem:[%s295 + $0xc0] sm:$0xff] %vm792, %v1715
        %1748 = vst.msk [vmem:[%s295 + $0xc8] sm:$0xff] %vm792, %v1716
        %1749 = vst.msk [vmem:[%s295 + $0xd0] sm:$0xff] %vm792, %v1717
        %1750 = vst.msk [vmem:[%s295 + $0xd8] sm:$0xff] %vm792, %v1718
        %1751 = vst.msk [vmem:[%s295 + $0xe0] sm:$0xff] %vm792, %v1719
        %1752 = vst.msk [vmem:[%s295 + $0xe8] sm:$0xff] %vm792, %v1720
        %1753 = vst.msk [vmem:[%s295 + $0xf0] sm:$0xff] %vm792, %v1721
        %1754 = vst.msk [vmem:[%s295 + $0xf8] sm:$0xff] %vm792, %v1722
      $region55: #{tpu_custom_call.1} parent=39 // pred_fallthru
        _
      %p1755 = scmp.lt.s32.totalorder %s20, 1
      %s1756 = scalar_select %p1755, %s20, 1
      %s1757 = smul.addr %s1756, 32
      %s1758 = smul.addr %s1757, 8
      %s1759 = scalar_lea.vmem %s5, %s1758
      // Predicated region
      $region56: #{tpu_custom_call.1} parent=39 // pred_check
        %p1760 = pneg %p168
      $region57: #{tpu_custom_call.1} parent=39 // pred_check_branch
        %1762 = sbr.rel (%p1760) target = $region59
      $region58: #{tpu_custom_call.1} parent=39 // pred_region
        _
      $region59: #{tpu_custom_call.1} parent=39 // pred_fallthru
        _
      // Predicated region
      $region60: #{tpu_custom_call.1} parent=39 // pred_check
        %p1763 = pneg %p168
      $region61: #{tpu_custom_call.1} parent=39 // pred_check_branch
        %1765 = sbr.rel (%p1763) target = $region63
      $region62: #{tpu_custom_call.1} parent=39 // pred_region
        %p1766 = scmp.lt.s32.totalorder %s20, 1
        %s1767 = scalar_select %p1766, %s20, 1
        %s1768 = smul.addr %s1767, 32
        %s1769 = smul.addr %s1768, 8
        %s1770 = scalar_lea.vmem %s5, %s1769
      $region63: #{tpu_custom_call.1} parent=39 // pred_fallthru
        _
    $region40: #{tpu_custom_call.1} parent=5 // pred_fallthru
      _
    %p1771 = scmp.le.s32.totalorder 2, %s11
    // Predicated region
    $region64: #{tpu_custom_call.1} parent=5 // pred_check
      %p1772 = pneg %p1771
    $region65: #{tpu_custom_call.1} parent=5 // pred_check_branch
      %1774 = sbr.rel (%p1772) target = $region67
    $region66: #{tpu_custom_call.1} parent=5 // pred_region
      %s1775 = ssub.s32 %s11, 2
    $region67: #{tpu_custom_call.1} parent=5 // pred_fallthru
      _
  $region6: #{tpu_custom_call.1} parent=0 // loop_footer
    %s15 = sadd.s32 1, %s11
  $region7: #{tpu_custom_call.1} parent=0 // loop_footer_branch
    %10 = sbr.rel target = $region3
  $region8: #{tpu_custom_call.1} parent=0 // loop_exit
    _

</llo_original>
